<compile_context>
chip_gen: v6e
topology: v6e:2x2x1
jax: 0.10.0
libtpu: 0.0.40
codegen_flags: <defaults>
</compile_context>

<pallas_src>
import functools

import numpy as np
import jax
import jax.numpy as jnp
from jax.experimental import pallas as pl
from jax.experimental.pallas import tpu as pltpu

_ROW0 = 8  # first interior row inside the H-padded scratch (sublane aligned)


def _conv_bn_relu_block(xf, p_ref, w_ref, g_ref, b_ref, eps):
    """One [3x3 reflect-pad conv -> BatchNorm(batch stats) -> ReLU] block.

    xf:     (N, H, W*Cin)  f32 value; NHWC with (W, C) flattened onto lanes.
    p_ref:  (N, _ROW0+H+1, W*Cin) VMEM scratch holding the H-reflect-padded rows.
    w_ref:  (3, W*Cin, W*Cout) banded conv weights (horizontal taps + reflect
            W-padding folded into the band structure), one slab per vertical tap.
    g_ref:  (1, Cout) BatchNorm gamma.     b_ref: (1, Cout) BatchNorm beta.
    Returns (N*H, W*Cout) f32.
    """
    N, H, L_in = xf.shape
    L_out = w_ref.shape[-1]
    cout = g_ref.shape[-1]
    width = L_out // cout
    count = float(N * H * width)  # elements per channel for the batch stats

    # ---- reflect pad along H (pad=1) into VMEM scratch.  Interior starts at a
    # sublane-aligned row (_ROW0) so the big store is unmasked / unrotated.
    p_ref[:, _ROW0:_ROW0 + H, :] = xf
    p_ref[:, _ROW0 - 1:_ROW0, :] = p_ref[:, _ROW0 + 1:_ROW0 + 2, :]      # row -1 -> 1
    p_ref[:, _ROW0 + H:_ROW0 + H + 1, :] = p_ref[:, _ROW0 + H - 2:_ROW0 + H - 1, :]  # H -> H-2

    # ---- conv: 3 MXU matmuls (one per vertical tap); K = W*Cin, Nlanes = W*Cout.
    acc = None
    for dy in range(3):
        a = p_ref[:, _ROW0 - 1 + dy:_ROW0 - 1 + dy + H, :].reshape(N * H, L_in)
        part = jnp.dot(a, w_ref[dy], preferred_element_type=jnp.float32)
        acc = part if acc is None else acc + part              # (N*H, W*Cout)

    # ---- BatchNorm2d (training-mode batch stats), single-pass sum / sum-of-squares.
    # Channel c lives at lanes {w*Cout + c}; gather/scatter across that
    # interleaving is done with tiny 0/1 indicator matmuls (stays on the MXU).
    lane = jax.lax.broadcasted_iota(jnp.int32, (L_out, cout), 0)
    chan = jax.lax.broadcasted_iota(jnp.int32, (L_out, cout), 1)
    gather = jnp.where(lane % cout == chan, 1.0, 0.0).astype(jnp.float32)     # (L_out, Cout)
    lane_t = jax.lax.broadcasted_iota(jnp.int32, (cout, L_out), 1)
    chan_t = jax.lax.broadcasted_iota(jnp.int32, (cout, L_out), 0)
    scatter = jnp.where(lane_t % cout == chan_t, 1.0, 0.0).astype(jnp.float32)  # (Cout, L_out)

    col_s = jnp.sum(acc, axis=0, keepdims=True)                 # (1, L_out)
    col_ss = jnp.sum(acc * acc, axis=0, keepdims=True)          # (1, L_out)
    s_c = jnp.dot(col_s, gather, preferred_element_type=jnp.float32)    # (1, Cout)
    ss_c = jnp.dot(col_ss, gather, preferred_element_type=jnp.float32)  # (1, Cout)
    mean = s_c / count
    var = ss_c / count - mean * mean
    scale_c = g_ref[...] * jax.lax.rsqrt(var + eps)             # gamma / sqrt(var+eps)
    shift_c = b_ref[...] - mean * scale_c                       # beta - mean*scale
    scale_l = jnp.dot(scale_c, scatter, preferred_element_type=jnp.float32)  # (1, L_out)
    shift_l = jnp.dot(shift_c, scatter, preferred_element_type=jnp.float32)  # (1, L_out)

    # ---- folded affine + ReLU: one multiply-add + max on the big tensor.
    return jnp.maximum(acc * scale_l + shift_l, 0.0)            # (N*H, W*Cout)


def _fused_convlayer_kernel(x_ref, w1_ref, g1_ref, bt1_ref, w2_ref, g2_ref, bt2_ref,
                            o_ref, p1_ref, p2_ref, *, eps):
    N, H, _ = x_ref.shape
    h1 = _conv_bn_relu_block(x_ref[...], p1_ref, w1_ref, g1_ref, bt1_ref, eps)   # (N*H, W*C1)
    h1 = h1.reshape(N, H, h1.shape[-1])                                          # leading-dim split only
    y = _conv_bn_relu_block(h1, p2_ref, w2_ref, g2_ref, bt2_ref, eps)            # (N*H, W*C2)
    o_ref[...] = y.astype(o_ref.dtype)                                           # dense (32,128) store


def _band_conv_weights(w_hwio, width):
    """One-time weight preprocessing (numpy, off the hot path): expand a
    (3,3,Cin,Cout) kernel into 3 banded matrices (width*Cin, width*Cout), one per
    vertical tap, with the horizontal taps AND the reflect W-padding folded in."""
    kh, kw, cin, cout = w_hwio.shape
    w_np = np.asarray(w_hwio, dtype=np.float32)
    bands = np.zeros((kh, width * cin, width * cout), np.float32)
    for dy in range(kh):
        for wo in range(width):
            for dx in range(kw):
                j = wo + dx - 1
                if j < 0:
                    j = -j                     # reflect: -1 -> 1
                elif j >= width:
                    j = 2 * width - 2 - j      # reflect: W -> W-2
                bands[dy, j * cin:(j + 1) * cin, wo * cout:(wo + 1) * cout] += w_np[dy, dx]
    return jnp.asarray(bands)


def init_conv_layer_params(key, n_kernels):
    """Deterministic synthetic params: conv (w, b) + batchnorm (gamma, beta) per block."""
    params = []
    for i in range(len(n_kernels) - 1):
        cin, cout = n_kernels[i], n_kernels[i + 1]
        key, kw, kb, kg, kbeta = jax.random.split(key, 5)
        bound = 1.0 / jnp.sqrt(cin * 9)
        w = jax.random.uniform(kw, (3, 3, cin, cout), jnp.float32, -bound, bound)
        b = jax.random.uniform(kb, (cout,), jnp.float32, -bound, bound)
        gamma = 1.0 + 0.1 * jax.random.normal(kg, (cout,), jnp.float32)
        beta = 0.1 * jax.random.normal(kbeta, (cout,), jnp.float32)
        params.append((w, b, gamma, beta))
    return params


def prepare_conv_layer_params(params, width):
    """One-time transform of module params into the kernel's banded-weight form."""
    prepped = []
    for (w, b, gamma, beta) in params:
        cout = w.shape[-1]
        # Conv bias is dropped: with BatchNorm using batch statistics the bias is
        # exactly cancelled by the mean subtraction (it only affects the
        # non-materialized running stats).
        del b
        prepped.append((_band_conv_weights(w, width),
                        gamma.reshape(1, cout).astype(jnp.float32),
                        beta.reshape(1, cout).astype(jnp.float32)))
    return prepped


def conv_layer_forward(x_nchw, prepped, eps=1e-5):
    """Equivalent of ConvLayer([C0, C1, C2]).forward(x), x in NCHW."""
    assert len(prepped) == 2, "fused kernel is specialized to two conv blocks"
    N, C0, H, W = x_nchw.shape
    (B1, g1, bt1), (B2, g2, bt2) = prepped
    C1, C2 = g1.shape[-1], g2.shape[-1]

    # NCHW -> NHWC -> (N, H, W*C0): layout-only glue, done once at the boundary.
    x_flat = jnp.transpose(x_nchw, (0, 2, 3, 1)).reshape(N, H, W * C0)

    out = pl.pallas_call(
        functools.partial(_fused_convlayer_kernel, eps=eps),
        out_shape=jax.ShapeDtypeStruct((N * H, W * C2), jnp.float32),
        grid=(1,),
        in_specs=[
            pl.BlockSpec((N, H, W * C0), lambda i: (0, 0, 0)),
            pl.BlockSpec(B1.shape, lambda i: (0, 0, 0)),
            pl.BlockSpec((1, C1), lambda i: (0, 0)),
            pl.BlockSpec((1, C1), lambda i: (0, 0)),
            pl.BlockSpec(B2.shape, lambda i: (0, 0, 0)),
            pl.BlockSpec((1, C2), lambda i: (0, 0)),
            pl.BlockSpec((1, C2), lambda i: (0, 0)),
        ],
        out_specs=pl.BlockSpec((N * H, W * C2), lambda i: (0, 0)),
        scratch_shapes=[
            pltpu.VMEM((N, _ROW0 + H + 1, W * C0), jnp.float32),  # H-padded layer-1 input
            pltpu.VMEM((N, _ROW0 + H + 1, W * C1), jnp.float32),  # H-padded layer-2 input
        ],
        compiler_params=pltpu.CompilerParams(dimension_semantics=("arbitrary",)),
    )(x_flat, B1, g1, bt1, B2, g2, bt2)

    # (N*H, W*C2) -> NHWC -> NCHW
    return jnp.transpose(out.reshape(N, H, W, C2), (0, 3, 1, 2))


def _reference_forward(x_nchw, params, eps=1e-5):
    """Pure-JAX reference (includes the conv bias; it cancels under batch-stat BN)."""
    x = jnp.transpose(x_nchw, (0, 2, 3, 1))
    for (w, b, gamma, beta) in params:
        xp = jnp.pad(x, ((0, 0), (1, 1), (1, 1), (0, 0)), mode="reflect")
        y = jax.lax.conv_general_dilated(
            xp, w, window_strides=(1, 1), padding="VALID",
            dimension_numbers=("NHWC", "HWIO", "NHWC")) + b
        mean = jnp.mean(y, axis=(0, 1, 2), keepdims=True)
        var = jnp.mean((y - mean) ** 2, axis=(0, 1, 2), keepdims=True)
        x = jnp.maximum(gamma * (y - mean) * jax.lax.rsqrt(var + eps) + beta, 0.0)
    return jnp.transpose(x, (0, 3, 1, 2))


if __name__ == "__main__":
    key = jax.random.PRNGKey(0)
    kx, kp = jax.random.split(key)
    n_kernels = [4, 8, 8]
    x = jax.random.normal(kx, (2, n_kernels[0], 16, 16), jnp.float32)  # NCHW
    params = init_conv_layer_params(kp, n_kernels)
    prepped = prepare_conv_layer_params(params, width=x.shape[-1])

    out = jax.block_until_ready(conv_layer_forward(x, prepped))
    ref = jax.block_until_ready(_reference_forward(x, params))

    assert out.shape == (2, n_kernels[-1], 16, 16), out.shape
    err = float(jnp.max(jnp.abs(out - ref)))
    assert err < 2e-4, err
    print("KERNEL_OK")
</pallas_src>

<mosaic_0001>
module attributes {stable_mosaic.version = 11 : i64} {
  func.func @_fused_convlayer_kernel(%arg0: i32, %arg1: memref<2x16x64xf32, #tpu.memory_space<vmem>>, %arg2: memref<3x64x128xf32, #tpu.memory_space<vmem>>, %arg3: memref<1x8xf32, #tpu.memory_space<vmem>>, %arg4: memref<1x8xf32, #tpu.memory_space<vmem>>, %arg5: memref<3x128x128xf32, #tpu.memory_space<vmem>>, %arg6: memref<1x8xf32, #tpu.memory_space<vmem>>, %arg7: memref<1x8xf32, #tpu.memory_space<vmem>>, %arg8: memref<32x128xf32, #tpu.memory_space<vmem>>, %arg9: memref<2x25x64xf32, #tpu.memory_space<vmem>>, %arg10: memref<2x25x128xf32, #tpu.memory_space<vmem>>) attributes {dimension_semantics = [#tpu.dimension_semantics<arbitrary>], iteration_bounds = array<i64: 1>, scalar_prefetch = 0 : i64, scratch_operands = 2 : i64, tpu.core_type = #tpu.core_type<tc>, window_params = [{pipeline_mode = #tpu.pipeline_mode<synchronous>, transform_indices = @transform_0, window_bounds = array<i64: 2, 16, 64>}, {pipeline_mode = #tpu.pipeline_mode<synchronous>, transform_indices = @transform_1, window_bounds = array<i64: 3, 64, 128>}, {pipeline_mode = #tpu.pipeline_mode<synchronous>, transform_indices = @transform_2, window_bounds = array<i64: 1, 8>}, {pipeline_mode = #tpu.pipeline_mode<synchronous>, transform_indices = @transform_3, window_bounds = array<i64: 1, 8>}, {pipeline_mode = #tpu.pipeline_mode<synchronous>, transform_indices = @transform_4, window_bounds = array<i64: 3, 128, 128>}, {pipeline_mode = #tpu.pipeline_mode<synchronous>, transform_indices = @transform_5, window_bounds = array<i64: 1, 8>}, {pipeline_mode = #tpu.pipeline_mode<synchronous>, transform_indices = @transform_6, window_bounds = array<i64: 1, 8>}, {pipeline_mode = #tpu.pipeline_mode<synchronous>, transform_indices = @transform_7, window_bounds = array<i64: 32, 128>}]} {
    %c0 = arith.constant 0 : index
    %c0_0 = arith.constant 0 : index
    %c0_1 = arith.constant 0 : index
    %0 = vector.load %arg1[%c0, %c0_0, %c0_1] : memref<2x16x64xf32, #tpu.memory_space<vmem>>, vector<2x16x64xf32>
    %c0_2 = arith.constant 0 : index
    %c8 = arith.constant 8 : index
    %c0_3 = arith.constant 0 : index
    %1 = vector.load %arg9[%c0_2, %c8, %c0_3] : memref<2x25x64xf32, #tpu.memory_space<vmem>>, vector<2x16x64xf32>
    tpu.vector_store %arg9[%c0_2, %c8, %c0_3], %0 {strides = array<i32>} : memref<2x25x64xf32, #tpu.memory_space<vmem>>, vector<2x16x64xf32>,
    %c0_4 = arith.constant 0 : index
    %c9 = arith.constant 9 : index
    %c0_5 = arith.constant 0 : index
    %2 = vector.load %arg9[%c0_4, %c9, %c0_5] : memref<2x25x64xf32, #tpu.memory_space<vmem>>, vector<2x1x64xf32>
    %c0_6 = arith.constant 0 : index
    %c7 = arith.constant 7 : index
    %c0_7 = arith.constant 0 : index
    %3 = vector.load %arg9[%c0_6, %c7, %c0_7] : memref<2x25x64xf32, #tpu.memory_space<vmem>>, vector<2x1x64xf32>
    tpu.vector_store %arg9[%c0_6, %c7, %c0_7], %2 {strides = array<i32>} : memref<2x25x64xf32, #tpu.memory_space<vmem>>, vector<2x1x64xf32>,
    %c0_8 = arith.constant 0 : index
    %c22 = arith.constant 22 : index
    %c0_9 = arith.constant 0 : index
    %4 = vector.load %arg9[%c0_8, %c22, %c0_9] : memref<2x25x64xf32, #tpu.memory_space<vmem>>, vector<2x1x64xf32>
    %c0_10 = arith.constant 0 : index
    %c24 = arith.constant 24 : index
    %c0_11 = arith.constant 0 : index
    %5 = vector.load %arg9[%c0_10, %c24, %c0_11] : memref<2x25x64xf32, #tpu.memory_space<vmem>>, vector<2x1x64xf32>
    tpu.vector_store %arg9[%c0_10, %c24, %c0_11], %4 {strides = array<i32>} : memref<2x25x64xf32, #tpu.memory_space<vmem>>, vector<2x1x64xf32>,
    %c0_12 = arith.constant 0 : index
    %c7_13 = arith.constant 7 : index
    %c0_14 = arith.constant 0 : index
    %6 = vector.load %arg9[%c0_12, %c7_13, %c0_14] : memref<2x25x64xf32, #tpu.memory_space<vmem>>, vector<2x16x64xf32>
    %7 = vector.shape_cast %6 : vector<2x16x64xf32> to vector<32x64xf32>
    %c0_15 = arith.constant 0 : index
    %c0_16 = arith.constant 0 : index
    %c0_17 = arith.constant 0 : index
    %8 = vector.load %arg2[%c0_15, %c0_16, %c0_17] : memref<3x64x128xf32, #tpu.memory_space<vmem>>, vector<1x64x128xf32>
    %9 = vector.shape_cast %8 : vector<1x64x128xf32> to vector<64x128xf32>
    %cst = arith.constant dense<0.000000e+00> : vector<32x128xf32>
    %10 = tpu.matmul %7, %9, %cst {dimension_numbers = #tpu.dot_dimension_numbers<[1], [0], [0], [1], [0, 0, 1, 1], [], []>} : vector<32x64xf32>, vector<64x128xf32>, vector<32x128xf32> -> vector<32x128xf32>
    %c0_18 = arith.constant 0 : index
    %c8_19 = arith.constant 8 : index
    %c0_20 = arith.constant 0 : index
    %11 = vector.load %arg9[%c0_18, %c8_19, %c0_20] : memref<2x25x64xf32, #tpu.memory_space<vmem>>, vector<2x16x64xf32>
    %12 = vector.shape_cast %11 : vector<2x16x64xf32> to vector<32x64xf32>
    %c1 = arith.constant 1 : index
    %c0_21 = arith.constant 0 : index
    %c0_22 = arith.constant 0 : index
    %13 = vector.load %arg2[%c1, %c0_21, %c0_22] : memref<3x64x128xf32, #tpu.memory_space<vmem>>, vector<1x64x128xf32>
    %14 = vector.shape_cast %13 : vector<1x64x128xf32> to vector<64x128xf32>
    %cst_23 = arith.constant dense<0.000000e+00> : vector<32x128xf32>
    %15 = tpu.matmul %12, %14, %cst_23 {dimension_numbers = #tpu.dot_dimension_numbers<[1], [0], [0], [1], [0, 0, 1, 1], [], []>} : vector<32x64xf32>, vector<64x128xf32>, vector<32x128xf32> -> vector<32x128xf32>
    %16 = arith.addf %10, %15 : vector<32x128xf32>
    %c0_24 = arith.constant 0 : index
    %c9_25 = arith.constant 9 : index
    %c0_26 = arith.constant 0 : index
    %17 = vector.load %arg9[%c0_24, %c9_25, %c0_26] : memref<2x25x64xf32, #tpu.memory_space<vmem>>, vector<2x16x64xf32>
    %18 = vector.shape_cast %17 : vector<2x16x64xf32> to vector<32x64xf32>
    %c2 = arith.constant 2 : index
    %c0_27 = arith.constant 0 : index
    %c0_28 = arith.constant 0 : index
    %19 = vector.load %arg2[%c2, %c0_27, %c0_28] : memref<3x64x128xf32, #tpu.memory_space<vmem>>, vector<1x64x128xf32>
    %20 = vector.shape_cast %19 : vector<1x64x128xf32> to vector<64x128xf32>
    %cst_29 = arith.constant dense<0.000000e+00> : vector<32x128xf32>
    %21 = tpu.matmul %18, %20, %cst_29 {dimension_numbers = #tpu.dot_dimension_numbers<[1], [0], [0], [1], [0, 0, 1, 1], [], []>} : vector<32x64xf32>, vector<64x128xf32>, vector<32x128xf32> -> vector<32x128xf32>
    %22 = arith.addf %16, %21 : vector<32x128xf32>
    %23 = tpu.iota {dimensions = array<i32: 0>} : vector<128x8xi32>
    %24 = tpu.iota {dimensions = array<i32: 1>} : vector<128x8xi32>
    %c8_i32 = arith.constant 8 : i32
    %c0_i32 = arith.constant 0 : i32
    %25 = arith.cmpi eq, %c8_i32, %c0_i32 : i32
    %c1_i32 = arith.constant 1 : i32
    %26 = arith.select %25, %c1_i32, %c8_i32 : i32
    %27 = vector.broadcast %26 : i32 to vector<128x8xi32>
    %28 = arith.remsi %23, %27 : vector<128x8xi32>
    %c0_i32_30 = arith.constant 0 : i32
    %29 = vector.broadcast %c0_i32_30 : i32 to vector<128x8xi32>
    %30 = arith.cmpi ne, %28, %29 : vector<128x8xi32>
    %c0_i32_31 = arith.constant 0 : i32
    %31 = vector.broadcast %c0_i32_31 : i32 to vector<128x8xi32>
    %32 = arith.cmpi slt, %28, %31 : vector<128x8xi32>
    %c0_i32_32 = arith.constant 0 : i32
    %33 = arith.cmpi slt, %26, %c0_i32_32 : i32
    %34 = vector.broadcast %33 : i1 to vector<128x8xi1>
    %35 = vector.broadcast %34 : vector<128x8xi1> to vector<128x8xi1>
    %36 = arith.xori %32, %35 : vector<128x8xi1>
    %37 = arith.andi %36, %30 : vector<128x8xi1>
    %38 = vector.broadcast %26 : i32 to vector<128x8xi32>
    %39 = arith.addi %28, %38 : vector<128x8xi32>
    %40 = arith.select %37, %39, %28 : vector<128x8xi1>, vector<128x8xi32>
    %41 = arith.cmpi eq, %40, %24 : vector<128x8xi32>
    %cst_33 = arith.constant 1.000000e+00 : f32
    %cst_34 = arith.constant 0.000000e+00 : f32
    %42 = vector.broadcast %cst_33 : f32 to vector<128x8xf32>
    %43 = vector.broadcast %cst_34 : f32 to vector<128x8xf32>
    %44 = arith.select %41, %42, %43 : vector<128x8xi1>, vector<128x8xf32>
    %45 = tpu.iota {dimensions = array<i32: 1>} : vector<8x128xi32>
    %46 = tpu.iota {dimensions = array<i32: 0>} : vector<8x128xi32>
    %c8_i32_35 = arith.constant 8 : i32
    %c0_i32_36 = arith.constant 0 : i32
    %47 = arith.cmpi eq, %c8_i32_35, %c0_i32_36 : i32
    %c1_i32_37 = arith.constant 1 : i32
    %48 = arith.select %47, %c1_i32_37, %c8_i32_35 : i32
    %49 = vector.broadcast %48 : i32 to vector<8x128xi32>
    %50 = arith.remsi %45, %49 : vector<8x128xi32>
    %c0_i32_38 = arith.constant 0 : i32
    %51 = vector.broadcast %c0_i32_38 : i32 to vector<8x128xi32>
    %52 = arith.cmpi ne, %50, %51 : vector<8x128xi32>
    %c0_i32_39 = arith.constant 0 : i32
    %53 = vector.broadcast %c0_i32_39 : i32 to vector<8x128xi32>
    %54 = arith.cmpi slt, %50, %53 : vector<8x128xi32>
    %c0_i32_40 = arith.constant 0 : i32
    %55 = arith.cmpi slt, %48, %c0_i32_40 : i32
    %56 = vector.broadcast %55 : i1 to vector<8x128xi1>
    %57 = vector.broadcast %56 : vector<8x128xi1> to vector<8x128xi1>
    %58 = arith.xori %54, %57 : vector<8x128xi1>
    %59 = arith.andi %58, %52 : vector<8x128xi1>
    %60 = vector.broadcast %48 : i32 to vector<8x128xi32>
    %61 = arith.addi %50, %60 : vector<8x128xi32>
    %62 = arith.select %59, %61, %50 : vector<8x128xi1>, vector<8x128xi32>
    %63 = arith.cmpi eq, %62, %46 : vector<8x128xi32>
    %cst_41 = arith.constant 1.000000e+00 : f32
    %cst_42 = arith.constant 0.000000e+00 : f32
    %64 = vector.broadcast %cst_41 : f32 to vector<8x128xf32>
    %65 = vector.broadcast %cst_42 : f32 to vector<8x128xf32>
    %66 = arith.select %63, %64, %65 : vector<8x128xi1>, vector<8x128xf32>
    %cst_43 = arith.constant dense<0.000000e+00> : vector<128xf32>
    %67 = vector.multi_reduction <add>, %22, %cst_43 [0] : vector<32x128xf32> to vector<128xf32>
    %68 = vector.shape_cast %67 : vector<128xf32> to vector<1x128xf32>
    %69 = arith.mulf %22, %22 : vector<32x128xf32>
    %cst_44 = arith.constant dense<0.000000e+00> : vector<128xf32>
    %70 = vector.multi_reduction <add>, %69, %cst_44 [0] : vector<32x128xf32> to vector<128xf32>
    %71 = vector.shape_cast %70 : vector<128xf32> to vector<1x128xf32>
    %cst_45 = arith.constant dense<0.000000e+00> : vector<1x8xf32>
    %72 = tpu.matmul %68, %44, %cst_45 {dimension_numbers = #tpu.dot_dimension_numbers<[1], [0], [0], [1], [0, 0, 1, 1], [], []>} : vector<1x128xf32>, vector<128x8xf32>, vector<1x8xf32> -> vector<1x8xf32>
    %cst_46 = arith.constant dense<0.000000e+00> : vector<1x8xf32>
    %73 = tpu.matmul %71, %44, %cst_46 {dimension_numbers = #tpu.dot_dimension_numbers<[1], [0], [0], [1], [0, 0, 1, 1], [], []>} : vector<1x128xf32>, vector<128x8xf32>, vector<1x8xf32> -> vector<1x8xf32>
    %cst_47 = arith.constant 5.120000e+02 : f32
    %74 = vector.broadcast %cst_47 : f32 to vector<1x8xf32>
    %75 = arith.divf %72, %74 : vector<1x8xf32>
    %cst_48 = arith.constant 5.120000e+02 : f32
    %76 = vector.broadcast %cst_48 : f32 to vector<1x8xf32>
    %77 = arith.divf %73, %76 : vector<1x8xf32>
    %78 = arith.mulf %75, %75 : vector<1x8xf32>
    %79 = arith.subf %77, %78 : vector<1x8xf32>
    %c0_49 = arith.constant 0 : index
    %c0_50 = arith.constant 0 : index
    %80 = vector.load %arg3[%c0_49, %c0_50] : memref<1x8xf32, #tpu.memory_space<vmem>>, vector<1x8xf32>
    %cst_51 = arith.constant 9.99999974E-6 : f32
    %81 = vector.broadcast %cst_51 : f32 to vector<1x8xf32>
    %82 = arith.addf %79, %81 : vector<1x8xf32>
    %83 = math.rsqrt %82 : vector<1x8xf32>
    %84 = arith.mulf %80, %83 : vector<1x8xf32>
    %c0_52 = arith.constant 0 : index
    %c0_53 = arith.constant 0 : index
    %85 = vector.load %arg4[%c0_52, %c0_53] : memref<1x8xf32, #tpu.memory_space<vmem>>, vector<1x8xf32>
    %86 = arith.mulf %75, %84 : vector<1x8xf32>
    %87 = arith.subf %85, %86 : vector<1x8xf32>
    %cst_54 = arith.constant dense<0.000000e+00> : vector<1x128xf32>
    %88 = tpu.matmul %84, %66, %cst_54 {dimension_numbers = #tpu.dot_dimension_numbers<[1], [0], [0], [1], [0, 0, 1, 1], [], []>} : vector<1x8xf32>, vector<8x128xf32>, vector<1x128xf32> -> vector<1x128xf32>
    %cst_55 = arith.constant dense<0.000000e+00> : vector<1x128xf32>
    %89 = tpu.matmul %87, %66, %cst_55 {dimension_numbers = #tpu.dot_dimension_numbers<[1], [0], [0], [1], [0, 0, 1, 1], [], []>} : vector<1x8xf32>, vector<8x128xf32>, vector<1x128xf32> -> vector<1x128xf32>
    %90 = vector.broadcast %88 : vector<1x128xf32> to vector<32x128xf32>
    %91 = arith.mulf %22, %90 : vector<32x128xf32>
    %92 = vector.broadcast %89 : vector<1x128xf32> to vector<32x128xf32>
    %93 = arith.addf %91, %92 : vector<32x128xf32>
    %cst_56 = arith.constant 0.000000e+00 : f32
    %94 = vector.broadcast %cst_56 : f32 to vector<32x128xf32>
    %95 = arith.maximumf %93, %94 : vector<32x128xf32>
    %96 = vector.shape_cast %95 : vector<32x128xf32> to vector<2x16x128xf32>
    %c0_57 = arith.constant 0 : index
    %c8_58 = arith.constant 8 : index
    %c0_59 = arith.constant 0 : index
    %97 = vector.load %arg10[%c0_57, %c8_58, %c0_59] : memref<2x25x128xf32, #tpu.memory_space<vmem>>, vector<2x16x128xf32>
    tpu.vector_store %arg10[%c0_57, %c8_58, %c0_59], %96 {strides = array<i32>} : memref<2x25x128xf32, #tpu.memory_space<vmem>>, vector<2x16x128xf32>,
    %c0_60 = arith.constant 0 : index
    %c9_61 = arith.constant 9 : index
    %c0_62 = arith.constant 0 : index
    %98 = vector.load %arg10[%c0_60, %c9_61, %c0_62] : memref<2x25x128xf32, #tpu.memory_space<vmem>>, vector<2x1x128xf32>
    %c0_63 = arith.constant 0 : index
    %c7_64 = arith.constant 7 : index
    %c0_65 = arith.constant 0 : index
    %99 = vector.load %arg10[%c0_63, %c7_64, %c0_65] : memref<2x25x128xf32, #tpu.memory_space<vmem>>, vector<2x1x128xf32>
    tpu.vector_store %arg10[%c0_63, %c7_64, %c0_65], %98 {strides = array<i32>} : memref<2x25x128xf32, #tpu.memory_space<vmem>>, vector<2x1x128xf32>,
    %c0_66 = arith.constant 0 : index
    %c22_67 = arith.constant 22 : index
    %c0_68 = arith.constant 0 : index
    %100 = vector.load %arg10[%c0_66, %c22_67, %c0_68] : memref<2x25x128xf32, #tpu.memory_space<vmem>>, vector<2x1x128xf32>
    %c0_69 = arith.constant 0 : index
    %c24_70 = arith.constant 24 : index
    %c0_71 = arith.constant 0 : index
    %101 = vector.load %arg10[%c0_69, %c24_70, %c0_71] : memref<2x25x128xf32, #tpu.memory_space<vmem>>, vector<2x1x128xf32>
    tpu.vector_store %arg10[%c0_69, %c24_70, %c0_71], %100 {strides = array<i32>} : memref<2x25x128xf32, #tpu.memory_space<vmem>>, vector<2x1x128xf32>,
    %c0_72 = arith.constant 0 : index
    %c7_73 = arith.constant 7 : index
    %c0_74 = arith.constant 0 : index
    %102 = vector.load %arg10[%c0_72, %c7_73, %c0_74] : memref<2x25x128xf32, #tpu.memory_space<vmem>>, vector<2x16x128xf32>
    %103 = vector.shape_cast %102 : vector<2x16x128xf32> to vector<32x128xf32>
    %c0_75 = arith.constant 0 : index
    %c0_76 = arith.constant 0 : index
    %c0_77 = arith.constant 0 : index
    %104 = vector.load %arg5[%c0_75, %c0_76, %c0_77] : memref<3x128x128xf32, #tpu.memory_space<vmem>>, vector<1x128x128xf32>
    %105 = vector.shape_cast %104 : vector<1x128x128xf32> to vector<128x128xf32>
    %cst_78 = arith.constant dense<0.000000e+00> : vector<32x128xf32>
    %106 = tpu.matmul %103, %105, %cst_78 {dimension_numbers = #tpu.dot_dimension_numbers<[1], [0], [0], [1], [0, 0, 1, 1], [], []>} : vector<32x128xf32>, vector<128x128xf32>, vector<32x128xf32> -> vector<32x128xf32>
    %c0_79 = arith.constant 0 : index
    %c8_80 = arith.constant 8 : index
    %c0_81 = arith.constant 0 : index
    %107 = vector.load %arg10[%c0_79, %c8_80, %c0_81] : memref<2x25x128xf32, #tpu.memory_space<vmem>>, vector<2x16x128xf32>
    %108 = vector.shape_cast %107 : vector<2x16x128xf32> to vector<32x128xf32>
    %c1_82 = arith.constant 1 : index
    %c0_83 = arith.constant 0 : index
    %c0_84 = arith.constant 0 : index
    %109 = vector.load %arg5[%c1_82, %c0_83, %c0_84] : memref<3x128x128xf32, #tpu.memory_space<vmem>>, vector<1x128x128xf32>
    %110 = vector.shape_cast %109 : vector<1x128x128xf32> to vector<128x128xf32>
    %cst_85 = arith.constant dense<0.000000e+00> : vector<32x128xf32>
    %111 = tpu.matmul %108, %110, %cst_85 {dimension_numbers = #tpu.dot_dimension_numbers<[1], [0], [0], [1], [0, 0, 1, 1], [], []>} : vector<32x128xf32>, vector<128x128xf32>, vector<32x128xf32> -> vector<32x128xf32>
    %112 = arith.addf %106, %111 : vector<32x128xf32>
    %c0_86 = arith.constant 0 : index
    %c9_87 = arith.constant 9 : index
    %c0_88 = arith.constant 0 : index
    %113 = vector.load %arg10[%c0_86, %c9_87, %c0_88] : memref<2x25x128xf32, #tpu.memory_space<vmem>>, vector<2x16x128xf32>
    %114 = vector.shape_cast %113 : vector<2x16x128xf32> to vector<32x128xf32>
    %c2_89 = arith.constant 2 : index
    %c0_90 = arith.constant 0 : index
    %c0_91 = arith.constant 0 : index
    %115 = vector.load %arg5[%c2_89, %c0_90, %c0_91] : memref<3x128x128xf32, #tpu.memory_space<vmem>>, vector<1x128x128xf32>
    %116 = vector.shape_cast %115 : vector<1x128x128xf32> to vector<128x128xf32>
    %cst_92 = arith.constant dense<0.000000e+00> : vector<32x128xf32>
    %117 = tpu.matmul %114, %116, %cst_92 {dimension_numbers = #tpu.dot_dimension_numbers<[1], [0], [0], [1], [0, 0, 1, 1], [], []>} : vector<32x128xf32>, vector<128x128xf32>, vector<32x128xf32> -> vector<32x128xf32>
    %118 = arith.addf %112, %117 : vector<32x128xf32>
    %119 = tpu.iota {dimensions = array<i32: 0>} : vector<128x8xi32>
    %120 = tpu.iota {dimensions = array<i32: 1>} : vector<128x8xi32>
    %c8_i32_93 = arith.constant 8 : i32
    %c0_i32_94 = arith.constant 0 : i32
    %121 = arith.cmpi eq, %c8_i32_93, %c0_i32_94 : i32
    %c1_i32_95 = arith.constant 1 : i32
    %122 = arith.select %121, %c1_i32_95, %c8_i32_93 : i32
    %123 = vector.broadcast %122 : i32 to vector<128x8xi32>
    %124 = arith.remsi %119, %123 : vector<128x8xi32>
    %c0_i32_96 = arith.constant 0 : i32
    %125 = vector.broadcast %c0_i32_96 : i32 to vector<128x8xi32>
    %126 = arith.cmpi ne, %124, %125 : vector<128x8xi32>
    %c0_i32_97 = arith.constant 0 : i32
    %127 = vector.broadcast %c0_i32_97 : i32 to vector<128x8xi32>
    %128 = arith.cmpi slt, %124, %127 : vector<128x8xi32>
    %c0_i32_98 = arith.constant 0 : i32
    %129 = arith.cmpi slt, %122, %c0_i32_98 : i32
    %130 = vector.broadcast %129 : i1 to vector<128x8xi1>
    %131 = vector.broadcast %130 : vector<128x8xi1> to vector<128x8xi1>
    %132 = arith.xori %128, %131 : vector<128x8xi1>
    %133 = arith.andi %132, %126 : vector<128x8xi1>
    %134 = vector.broadcast %122 : i32 to vector<128x8xi32>
    %135 = arith.addi %124, %134 : vector<128x8xi32>
    %136 = arith.select %133, %135, %124 : vector<128x8xi1>, vector<128x8xi32>
    %137 = arith.cmpi eq, %136, %120 : vector<128x8xi32>
    %cst_99 = arith.constant 1.000000e+00 : f32
    %cst_100 = arith.constant 0.000000e+00 : f32
    %138 = vector.broadcast %cst_99 : f32 to vector<128x8xf32>
    %139 = vector.broadcast %cst_100 : f32 to vector<128x8xf32>
    %140 = arith.select %137, %138, %139 : vector<128x8xi1>, vector<128x8xf32>
    %141 = tpu.iota {dimensions = array<i32: 1>} : vector<8x128xi32>
    %142 = tpu.iota {dimensions = array<i32: 0>} : vector<8x128xi32>
    %c8_i32_101 = arith.constant 8 : i32
    %c0_i32_102 = arith.constant 0 : i32
    %143 = arith.cmpi eq, %c8_i32_101, %c0_i32_102 : i32
    %c1_i32_103 = arith.constant 1 : i32
    %144 = arith.select %143, %c1_i32_103, %c8_i32_101 : i32
    %145 = vector.broadcast %144 : i32 to vector<8x128xi32>
    %146 = arith.remsi %141, %145 : vector<8x128xi32>
    %c0_i32_104 = arith.constant 0 : i32
    %147 = vector.broadcast %c0_i32_104 : i32 to vector<8x128xi32>
    %148 = arith.cmpi ne, %146, %147 : vector<8x128xi32>
    %c0_i32_105 = arith.constant 0 : i32
    %149 = vector.broadcast %c0_i32_105 : i32 to vector<8x128xi32>
    %150 = arith.cmpi slt, %146, %149 : vector<8x128xi32>
    %c0_i32_106 = arith.constant 0 : i32
    %151 = arith.cmpi slt, %144, %c0_i32_106 : i32
    %152 = vector.broadcast %151 : i1 to vector<8x128xi1>
    %153 = vector.broadcast %152 : vector<8x128xi1> to vector<8x128xi1>
    %154 = arith.xori %150, %153 : vector<8x128xi1>
    %155 = arith.andi %154, %148 : vector<8x128xi1>
    %156 = vector.broadcast %144 : i32 to vector<8x128xi32>
    %157 = arith.addi %146, %156 : vector<8x128xi32>
    %158 = arith.select %155, %157, %146 : vector<8x128xi1>, vector<8x128xi32>
    %159 = arith.cmpi eq, %158, %142 : vector<8x128xi32>
    %cst_107 = arith.constant 1.000000e+00 : f32
    %cst_108 = arith.constant 0.000000e+00 : f32
    %160 = vector.broadcast %cst_107 : f32 to vector<8x128xf32>
    %161 = vector.broadcast %cst_108 : f32 to vector<8x128xf32>
    %162 = arith.select %159, %160, %161 : vector<8x128xi1>, vector<8x128xf32>
    %cst_109 = arith.constant dense<0.000000e+00> : vector<128xf32>
    %163 = vector.multi_reduction <add>, %118, %cst_109 [0] : vector<32x128xf32> to vector<128xf32>
    %164 = vector.shape_cast %163 : vector<128xf32> to vector<1x128xf32>
    %165 = arith.mulf %118, %118 : vector<32x128xf32>
    %cst_110 = arith.constant dense<0.000000e+00> : vector<128xf32>
    %166 = vector.multi_reduction <add>, %165, %cst_110 [0] : vector<32x128xf32> to vector<128xf32>
    %167 = vector.shape_cast %166 : vector<128xf32> to vector<1x128xf32>
    %cst_111 = arith.constant dense<0.000000e+00> : vector<1x8xf32>
    %168 = tpu.matmul %164, %140, %cst_111 {dimension_numbers = #tpu.dot_dimension_numbers<[1], [0], [0], [1], [0, 0, 1, 1], [], []>} : vector<1x128xf32>, vector<128x8xf32>, vector<1x8xf32> -> vector<1x8xf32>
    %cst_112 = arith.constant dense<0.000000e+00> : vector<1x8xf32>
    %169 = tpu.matmul %167, %140, %cst_112 {dimension_numbers = #tpu.dot_dimension_numbers<[1], [0], [0], [1], [0, 0, 1, 1], [], []>} : vector<1x128xf32>, vector<128x8xf32>, vector<1x8xf32> -> vector<1x8xf32>
    %cst_113 = arith.constant 5.120000e+02 : f32
    %170 = vector.broadcast %cst_113 : f32 to vector<1x8xf32>
    %171 = arith.divf %168, %170 : vector<1x8xf32>
    %cst_114 = arith.constant 5.120000e+02 : f32
    %172 = vector.broadcast %cst_114 : f32 to vector<1x8xf32>
    %173 = arith.divf %169, %172 : vector<1x8xf32>
    %174 = arith.mulf %171, %171 : vector<1x8xf32>
    %175 = arith.subf %173, %174 : vector<1x8xf32>
    %c0_115 = arith.constant 0 : index
    %c0_116 = arith.constant 0 : index
    %176 = vector.load %arg6[%c0_115, %c0_116] : memref<1x8xf32, #tpu.memory_space<vmem>>, vector<1x8xf32>
    %cst_117 = arith.constant 9.99999974E-6 : f32
    %177 = vector.broadcast %cst_117 : f32 to vector<1x8xf32>
    %178 = arith.addf %175, %177 : vector<1x8xf32>
    %179 = math.rsqrt %178 : vector<1x8xf32>
    %180 = arith.mulf %176, %179 : vector<1x8xf32>
    %c0_118 = arith.constant 0 : index
    %c0_119 = arith.constant 0 : index
    %181 = vector.load %arg7[%c0_118, %c0_119] : memref<1x8xf32, #tpu.memory_space<vmem>>, vector<1x8xf32>
    %182 = arith.mulf %171, %180 : vector<1x8xf32>
    %183 = arith.subf %181, %182 : vector<1x8xf32>
    %cst_120 = arith.constant dense<0.000000e+00> : vector<1x128xf32>
    %184 = tpu.matmul %180, %162, %cst_120 {dimension_numbers = #tpu.dot_dimension_numbers<[1], [0], [0], [1], [0, 0, 1, 1], [], []>} : vector<1x8xf32>, vector<8x128xf32>, vector<1x128xf32> -> vector<1x128xf32>
    %cst_121 = arith.constant dense<0.000000e+00> : vector<1x128xf32>
    %185 = tpu.matmul %183, %162, %cst_121 {dimension_numbers = #tpu.dot_dimension_numbers<[1], [0], [0], [1], [0, 0, 1, 1], [], []>} : vector<1x8xf32>, vector<8x128xf32>, vector<1x128xf32> -> vector<1x128xf32>
    %186 = vector.broadcast %184 : vector<1x128xf32> to vector<32x128xf32>
    %187 = arith.mulf %118, %186 : vector<32x128xf32>
    %188 = vector.broadcast %185 : vector<1x128xf32> to vector<32x128xf32>
    %189 = arith.addf %187, %188 : vector<32x128xf32>
    %cst_122 = arith.constant 0.000000e+00 : f32
    %190 = vector.broadcast %cst_122 : f32 to vector<32x128xf32>
    %191 = arith.maximumf %189, %190 : vector<32x128xf32>
    %c0_123 = arith.constant 0 : index
    %c0_124 = arith.constant 0 : index
    %192 = vector.load %arg8[%c0_123, %c0_124] : memref<32x128xf32, #tpu.memory_space<vmem>>, vector<32x128xf32>
    tpu.vector_store %arg8[%c0_123, %c0_124], %191 {strides = array<i32>} : memref<32x128xf32, #tpu.memory_space<vmem>>, vector<32x128xf32>,
    return
  }
  func.func @transform_0(%arg0: i32) -> (i32, i32, i32) {
    %c0_i32 = arith.constant 0 : i32
    %c0_i32_0 = arith.constant 0 : i32
    %c0_i32_1 = arith.constant 0 : i32
    %c0_i32_2 = arith.constant 0 : i32
    return %c0_i32, %c0_i32_0, %c0_i32_1 : i32, i32, i32
  }
  func.func @transform_1(%arg0: i32) -> (i32, i32, i32) {
    %c0_i32 = arith.constant 0 : i32
    %c0_i32_0 = arith.constant 0 : i32
    %c0_i32_1 = arith.constant 0 : i32
    %c0_i32_2 = arith.constant 0 : i32
    return %c0_i32, %c0_i32_0, %c0_i32_1 : i32, i32, i32
  }
  func.func @transform_2(%arg0: i32) -> (i32, i32) {
    %c0_i32 = arith.constant 0 : i32
    %c0_i32_0 = arith.constant 0 : i32
    %c0_i32_1 = arith.constant 0 : i32
    return %c0_i32, %c0_i32_0 : i32, i32
  }
  func.func @transform_3(%arg0: i32) -> (i32, i32) {
    %c0_i32 = arith.constant 0 : i32
    %c0_i32_0 = arith.constant 0 : i32
    %c0_i32_1 = arith.constant 0 : i32
    return %c0_i32, %c0_i32_0 : i32, i32
  }
  func.func @transform_4(%arg0: i32) -> (i32, i32, i32) {
    %c0_i32 = arith.constant 0 : i32
    %c0_i32_0 = arith.constant 0 : i32
    %c0_i32_1 = arith.constant 0 : i32
    %c0_i32_2 = arith.constant 0 : i32
    return %c0_i32, %c0_i32_0, %c0_i32_1 : i32, i32, i32
  }
  func.func @transform_5(%arg0: i32) -> (i32, i32) {
    %c0_i32 = arith.constant 0 : i32
    %c0_i32_0 = arith.constant 0 : i32
    %c0_i32_1 = arith.constant 0 : i32
    return %c0_i32, %c0_i32_0 : i32, i32
  }
  func.func @transform_6(%arg0: i32) -> (i32, i32) {
    %c0_i32 = arith.constant 0 : i32
    %c0_i32_0 = arith.constant 0 : i32
    %c0_i32_1 = arith.constant 0 : i32
    return %c0_i32, %c0_i32_0 : i32, i32
  }
  func.func @transform_7(%arg0: i32) -> (i32, i32) {
    %c0_i32 = arith.constant 0 : i32
    %c0_i32_0 = arith.constant 0 : i32
    %c0_i32_1 = arith.constant 0 : i32
    return %c0_i32, %c0_i32_0 : i32, i32
  }
}

</mosaic_0001>

<llo_original>
// kernel: tpu_custom_call.1
$region0: #{tpu_custom_call.1}
  #allocation0 [shape = 'u32[]', space=smem, size = 0x4, offset = 0x4, fixed_abs, tag = 'smem constant byte address 0x4 - core index']
  #allocation1 [shape = 'u32[144,128]{1,0:T(1,128)}', space=vmem, size = 0x12000, scoped, tag = 'internal scratch']
  #allocation2 [shape = 'f32[2,25,64]{2,1,0:T(8,128)}', space=vmem, size = 0x8000, scoped, tag = 'scratch operand']
  #allocation3 [shape = 'f32[2,25,128]{2,1,0:T(8,128)}', space=vmem, size = 0x8000, scoped, tag = 'scratch operand']
  %s0 = inlined_call_operand.hbm [shape: f32[2,16,64], index: 0, kind: input, shape index: {}]
  %s1 = inlined_call_operand.hbm [shape: f32[3,64,128], index: 1, kind: input, shape index: {}]
  %s2 = inlined_call_operand.vmem [shape: f32[1,8], index: 2, kind: input, shape index: {}]
  %s3 = inlined_call_operand.vmem [shape: f32[1,8], index: 3, kind: input, shape index: {}]
  %s4 = inlined_call_operand.hbm [shape: f32[3,128,128], index: 4, kind: input, shape index: {}]
  %s5 = inlined_call_operand.vmem [shape: f32[1,8], index: 5, kind: input, shape index: {}]
  %s6 = inlined_call_operand.vmem [shape: f32[1,8], index: 6, kind: input, shape index: {}]
  %s7 = inlined_call_operand.hbm [shape: f32[32,128], index: 7, kind: output, shape index: {}]
  %s8 = sld [smem:[#allocation0]]
  $region50: #{tpu_custom_call.1} parent=0
    _
  %s10 = ssub.s32 1, %s8
  %s11 = scalar_select 0, %s10, %s8
  $region1: #{tpu_custom_call.1} parent=0
    #allocation4 [shape = 'u8[16384]{0}', space=vmem, size = 0x4000, scoped, tag = 'input window, operand 0, single buffered']
    #allocation5 [shape = 's32[1]{0}', space=sflag, size = 0x4, scoped, tag = 'scoped memory for tpu_custom_call.1']
    #allocation6 [shape = 's32[1]{0}', space=sflag, size = 0x4, scoped, tag = 'scoped memory for tpu_custom_call.1']
    #allocation7 [shape = 'u8[98304]{0}', space=vmem, size = 0x18000, scoped, tag = 'input window, operand 1, single buffered']
    #allocation8 [shape = 's32[1]{0}', space=sflag, size = 0x4, scoped, tag = 'scoped memory for tpu_custom_call.1']
    #allocation9 [shape = 'u8[196608]{0}', space=vmem, size = 0x30000, scoped, tag = 'input window, operand 4, single buffered']
    #allocation10 [shape = 'u8[16384]{0}', space=vmem, size = 0x4000, scoped, tag = 'output window, operand 0, single buffered']
    %12 = vsyncpa [#allocation5], 0
    %13 = vsyncpa [#allocation8], 0
    %14 = vsyncpa [#allocation6], 0
    // Predicated region
    $region2: #{tpu_custom_call.1} parent=1 // pred_check
      _
    $region3: #{tpu_custom_call.1} parent=1 // pred_check_branch
      %16 = sbr.rel (0) target = $region5
    $region4: #{tpu_custom_call.1} parent=1 // pred_region
      %s18 = ssub.s32 512, 512
      %19 = vsyncadd [#allocation5], %s18
      %s20 = sshll.u32 [#allocation4], 4
      %s21 = int_to_ptr.vmem [resolvable:$true] %s20
      %26 = dma.hbm_to_vmem [thread:$0]  %s0, 512, %s21, [#allocation5], 128, 128, 8
    $region5: #{tpu_custom_call.1} parent=1 // pred_fallthru
      _
    // Predicated region
    $region6: #{tpu_custom_call.1} parent=1 // pred_check
      _
    $region7: #{tpu_custom_call.1} parent=1 // pred_check_branch
      %28 = sbr.rel (0) target = $region9
    $region8: #{tpu_custom_call.1} parent=1 // pred_region
      %s30 = ssub.s32 3072, 3072
      %31 = vsyncadd [#allocation8], %s30
      %s32 = sshll.u32 [#allocation7], 4
      %s33 = int_to_ptr.vmem [resolvable:$true] %s32
      %38 = dma.hbm_to_vmem [thread:$0]  %s1, 3072, %s33, [#allocation8], 128, 128, 8
    $region9: #{tpu_custom_call.1} parent=1 // pred_fallthru
      _
    // Predicated region
    $region10: #{tpu_custom_call.1} parent=1 // pred_check
      _
    $region11: #{tpu_custom_call.1} parent=1 // pred_check_branch
      %40 = sbr.rel (0) target = $region13
    $region12: #{tpu_custom_call.1} parent=1 // pred_region
      _
    $region13: #{tpu_custom_call.1} parent=1 // pred_fallthru
      _
    // Predicated region
    $region14: #{tpu_custom_call.1} parent=1 // pred_check
      _
    $region15: #{tpu_custom_call.1} parent=1 // pred_check_branch
      %42 = sbr.rel (0) target = $region17
    $region16: #{tpu_custom_call.1} parent=1 // pred_region
      _
    $region17: #{tpu_custom_call.1} parent=1 // pred_fallthru
      _
    // Predicated region
    $region18: #{tpu_custom_call.1} parent=1 // pred_check
      _
    $region19: #{tpu_custom_call.1} parent=1 // pred_check_branch
      %44 = sbr.rel (0) target = $region21
    $region20: #{tpu_custom_call.1} parent=1 // pred_region
      %s46 = ssub.s32 6144, 6144
      %47 = vsyncadd [#allocation8], %s46
      %s48 = sshll.u32 [#allocation9], 4
      %s49 = int_to_ptr.vmem [resolvable:$true] %s48
      %54 = dma.hbm_to_vmem [thread:$0]  %s4, 6144, %s49, [#allocation8], 128, 128, 8
    $region21: #{tpu_custom_call.1} parent=1 // pred_fallthru
      _
    // Predicated region
    $region22: #{tpu_custom_call.1} parent=1 // pred_check
      _
    $region23: #{tpu_custom_call.1} parent=1 // pred_check_branch
      %56 = sbr.rel (0) target = $region25
    $region24: #{tpu_custom_call.1} parent=1 // pred_region
      _
    $region25: #{tpu_custom_call.1} parent=1 // pred_fallthru
      _
    // Predicated region
    $region26: #{tpu_custom_call.1} parent=1 // pred_check
      _
    $region27: #{tpu_custom_call.1} parent=1 // pred_check_branch
      %58 = sbr.rel (0) target = $region29
    $region28: #{tpu_custom_call.1} parent=1 // pred_region
      _
    $region29: #{tpu_custom_call.1} parent=1 // pred_fallthru
      _
    // Predicated region
    $region30: #{tpu_custom_call.1} parent=1 // pred_check
      _
    $region31: #{tpu_custom_call.1} parent=1 // pred_check_branch
      %60 = sbr.rel (0) target = $region33
    $region32: #{tpu_custom_call.1} parent=1 // pred_region
      %61 = dma.done [#allocation5], 512
    $region33: #{tpu_custom_call.1} parent=1 // pred_fallthru
      _
    // Predicated region
    $region34: #{tpu_custom_call.1} parent=1 // pred_check
      _
    $region35: #{tpu_custom_call.1} parent=1 // pred_check_branch
      %63 = sbr.rel (0) target = $region37
    $region36: #{tpu_custom_call.1} parent=1 // pred_region
      %64 = dma.done [#allocation8], 3072
    $region37: #{tpu_custom_call.1} parent=1 // pred_fallthru
      _
    // Predicated region
    $region38: #{tpu_custom_call.1} parent=1 // pred_check
      _
    $region39: #{tpu_custom_call.1} parent=1 // pred_check_branch
      %66 = sbr.rel (0) target = $region41
    $region40: #{tpu_custom_call.1} parent=1 // pred_region
      %67 = dma.done [#allocation8], 6144
    $region41: #{tpu_custom_call.1} parent=1 // pred_fallthru
      _
    %v68 = vld [vmem:[#allocation4] sm:$0xff]
    %v69 = vld [vmem:[#allocation4 + $0x8] sm:$0xff]
    %v70 = vld [vmem:[#allocation4 + $0x10] sm:$0xff]
    %v71 = vld [vmem:[#allocation4 + $0x18] sm:$0xff]
    %vm72 = vcmask 523264
    %73 = vst.msk [vmem:[#allocation2 + $0x8] sm:$0xff] %vm72, %v68
    %74 = vst.msk [vmem:[#allocation2 + $0x10] sm:$0xff] %vm72, %v69
    %75 = vst.msk [vmem:[#allocation2 + $0x28] sm:$0xff] %vm72, %v70
    %76 = vst.msk [vmem:[#allocation2 + $0x30] sm:$0xff] %vm72, %v71
    %v77 = vld [vmem:[#allocation2 + $0x9] sm:$0x1]
    %v78 = vld [vmem:[#allocation2 + $0x29] sm:$0x1]
    %vm79 = vcmask 516096
    %80 = vst.msk [vmem:[#allocation2 + $0x7] sm:$0x1] %vm79, %v77
    %81 = vst.msk [vmem:[#allocation2 + $0x27] sm:$0x1] %vm79, %v78
    %v82 = vld [vmem:[#allocation2 + $0x16] sm:$0x1]
    %v83 = vld [vmem:[#allocation2 + $0x36] sm:$0x1]
    %84 = vst.msk [vmem:[#allocation2 + $0x18] sm:$0x1] %vm79, %v82
    %85 = vst.msk [vmem:[#allocation2 + $0x38] sm:$0x1] %vm79, %v83
    %v86 = vld [vmem:[#allocation2 + $0x7] sm:$0xff]
    %v87 = vld [vmem:[#allocation2 + $0xf] sm:$0xff]
    %v88 = vld [vmem:[#allocation2 + $0x27] sm:$0xff]
    %v89 = vld [vmem:[#allocation2 + $0x2f] sm:$0xff]
    %v90 = vld [vmem:[#allocation7] sm:$0xff]
    %v91 = vld [vmem:[#allocation7 + $0x8] sm:$0xff]
    %v92 = vld [vmem:[#allocation7 + $0x10] sm:$0xff]
    %v93 = vld [vmem:[#allocation7 + $0x18] sm:$0xff]
    %v94 = vld [vmem:[#allocation7 + $0x20] sm:$0xff]
    %v95 = vld [vmem:[#allocation7 + $0x28] sm:$0xff]
    %v96 = vld [vmem:[#allocation7 + $0x30] sm:$0xff]
    %v97 = vld [vmem:[#allocation7 + $0x38] sm:$0xff]
    %v98 = vld [vmem:[#allocation2 + $0x8] sm:$0xff]
    %v99 = vld [vmem:[#allocation2 + $0x10] sm:$0xff]
    %v100 = vld [vmem:[#allocation2 + $0x28] sm:$0xff]
    %v101 = vld [vmem:[#allocation2 + $0x30] sm:$0xff]
    %s102 = scalar_lea.vmem [#allocation7], 64
    %v103 = vld [vmem:[%s102] sm:$0xff]
    %v104 = vld [vmem:[%s102 + $0x8] sm:$0xff]
    %v105 = vld [vmem:[%s102 + $0x10] sm:$0xff]
    %v106 = vld [vmem:[%s102 + $0x18] sm:$0xff]
    %v107 = vld [vmem:[%s102 + $0x20] sm:$0xff]
    %v108 = vld [vmem:[%s102 + $0x28] sm:$0xff]
    %v109 = vld [vmem:[%s102 + $0x30] sm:$0xff]
    %v110 = vld [vmem:[%s102 + $0x38] sm:$0xff]
    %v112 = vsel %vm72, %v98, 0
    %v115 = vsel %vm72, %v99, 0
    %v118 = vsel %vm72, %v100, 0
    %v121 = vsel %vm72, %v101, 0
    %123 = vmatprep.subr.mxu0 0.0
    %124 = vmatpush1.msra.mxu0 0.0
    %125 = vmatprep.subr.mxu0 0.0
    %126 = vmatpush1.msra.mxu0 0.0
    %127 = vmatprep.subr.mxu0 0.0
    %128 = vmatpush1.msra.mxu0 0.0
    %129 = vmatprep.subr.mxu0 0.0
    %130 = vmatpush1.msra.mxu0 0.0
    %131 = vmatprep.subr.mxu0 0.0
    %132 = vmatpush1.msra.mxu0 0.0
    %133 = vmatprep.subr.mxu0 0.0
    %134 = vmatpush1.msra.mxu0 0.0
    %135 = vmatprep.subr.mxu0 0.0
    %136 = vmatpush1.msra.mxu0 0.0
    %137 = vmatprep.subr.mxu0 0.0
    %138 = vmatpush1.msra.mxu0 0.0
    %139 = vmatprep.subr.mxu0 0.0
    %140 = vmatpush1.msra.mxu0 %v110
    %141 = vmatprep.subr.mxu0 0.0
    %142 = vmatpush1.msra.mxu0 %v109
    %143 = vmatprep.subr.mxu0 0.0
    %144 = vmatpush1.msra.mxu0 %v108
    %145 = vmatprep.subr.mxu0 0.0
    %146 = vmatpush1.msra.mxu0 %v107
    %147 = vmatprep.subr.mxu0 0.0
    %148 = vmatpush1.msra.mxu0 %v106
    %149 = vmatprep.subr.mxu0 0.0
    %150 = vmatpush1.msra.mxu0 %v105
    %151 = vmatprep.subr.mxu0 0.0
    %152 = vmatpush1.msra.mxu0 %v104
    %153 = vmatprep.subr.mxu0 0.0
    %154 = vmatpush1.msra.mxu0 %v103
    %155 = vmatprep.subr.mxu0 0.0
    %156 = vmatpush2.msra.mxu0 0.0
    %157 = vmatprep.subr.mxu0 0.0
    %158 = vmatpush2.msra.mxu0 0.0
    %159 = vmatprep.subr.mxu0 0.0
    %160 = vmatpush2.msra.mxu0 0.0
    %161 = vmatprep.subr.mxu0 0.0
    %162 = vmatpush2.msra.mxu0 0.0
    %163 = vmatprep.subr.mxu0 0.0
    %164 = vmatpush2.msra.mxu0 0.0
    %165 = vmatprep.subr.mxu0 0.0
    %166 = vmatpush2.msra.mxu0 0.0
    %167 = vmatprep.subr.mxu0 0.0
    %168 = vmatpush2.msra.mxu0 0.0
    %169 = vmatprep.subr.mxu0 0.0
    %170 = vmatpush2.msra.mxu0 0.0
    %171 = vmatprep.subr.mxu0 0.0
    %172 = vmatpush2.msra.mxu0 0.0
    %173 = vmatprep.subr.mxu0 0.0
    %174 = vmatpush2.msra.mxu0 0.0
    %175 = vmatprep.subr.mxu0 0.0
    %176 = vmatpush2.msra.mxu0 0.0
    %177 = vmatprep.subr.mxu0 0.0
    %178 = vmatpush2.msra.mxu0 0.0
    %179 = vmatprep.subr.mxu0 0.0
    %180 = vmatpush2.msra.mxu0 0.0
    %181 = vmatprep.subr.mxu0 0.0
    %182 = vmatpush2.msra.mxu0 0.0
    %183 = vmatprep.subr.mxu0 0.0
    %184 = vmatpush2.msra.mxu0 0.0
    %185 = vmatprep.subr.mxu0 0.0
    %186 = vmatpush2.msra.mxu0 0.0
    %187 = vmatprep.mubr.f32.mxu0 0.0
    %188 = vmatmul.mubr.f32.gmra.mxu0 %v112
    %v189 = vpop.f32.mrf.mxu0
    %v190 = vadd.f32 0.0, %v189
    %v191 = vpop.f32.mrf.mxu0
    %192 = vmatprep.mubr.f32.mxu0 0.0
    %193 = vmatmul.mubr.f32.gmra.mxu0 %v115
    %v194 = vpop.f32.mrf.mxu0
    %v195 = vadd.f32 0.0, %v194
    %v196 = vpop.f32.mrf.mxu0
    %197 = vmatprep.mubr.f32.mxu0 0.0
    %198 = vmatmul.mubr.f32.gmra.mxu0 %v118
    %v199 = vpop.f32.mrf.mxu0
    %v200 = vadd.f32 0.0, %v199
    %v201 = vpop.f32.mrf.mxu0
    %202 = vmatprep.mubr.f32.mxu0 0.0
    %203 = vmatmul.mubr.f32.gmra.mxu0 %v121
    %v204 = vpop.f32.mrf.mxu0
    %v205 = vadd.f32 0.0, %v204
    %v206 = vpop.f32.mrf.mxu0
    %207 = vdwg.mxu0
    %v209 = vsel %vm72, %v86, 0
    %v212 = vsel %vm72, %v87, 0
    %v215 = vsel %vm72, %v88, 0
    %v218 = vsel %vm72, %v89, 0
    %220 = vmatprep.subr.mxu0 0.0
    %221 = vmatpush1.msra.mxu0 0.0
    %222 = vmatprep.subr.mxu0 0.0
    %223 = vmatpush1.msra.mxu0 0.0
    %224 = vmatprep.subr.mxu0 0.0
    %225 = vmatpush1.msra.mxu0 0.0
    %226 = vmatprep.subr.mxu0 0.0
    %227 = vmatpush1.msra.mxu0 0.0
    %228 = vmatprep.subr.mxu0 0.0
    %229 = vmatpush1.msra.mxu0 0.0
    %230 = vmatprep.subr.mxu0 0.0
    %231 = vmatpush1.msra.mxu0 0.0
    %232 = vmatprep.subr.mxu0 0.0
    %233 = vmatpush1.msra.mxu0 0.0
    %234 = vmatprep.subr.mxu0 0.0
    %235 = vmatpush1.msra.mxu0 0.0
    %236 = vmatprep.subr.mxu0 0.0
    %237 = vmatpush1.msra.mxu0 %v97
    %238 = vmatprep.subr.mxu0 0.0
    %239 = vmatpush1.msra.mxu0 %v96
    %240 = vmatprep.subr.mxu0 0.0
    %241 = vmatpush1.msra.mxu0 %v95
    %242 = vmatprep.subr.mxu0 0.0
    %243 = vmatpush1.msra.mxu0 %v94
    %244 = vmatprep.subr.mxu0 0.0
    %245 = vmatpush1.msra.mxu0 %v93
    %246 = vmatprep.subr.mxu0 0.0
    %247 = vmatpush1.msra.mxu0 %v92
    %248 = vmatprep.subr.mxu0 0.0
    %249 = vmatpush1.msra.mxu0 %v91
    %250 = vmatprep.subr.mxu0 0.0
    %251 = vmatpush1.msra.mxu0 %v90
    %252 = vmatprep.subr.mxu0 0.0
    %253 = vmatpush2.msra.mxu0 0.0
    %254 = vmatprep.subr.mxu0 0.0
    %255 = vmatpush2.msra.mxu0 0.0
    %256 = vmatprep.subr.mxu0 0.0
    %257 = vmatpush2.msra.mxu0 0.0
    %258 = vmatprep.subr.mxu0 0.0
    %259 = vmatpush2.msra.mxu0 0.0
    %260 = vmatprep.subr.mxu0 0.0
    %261 = vmatpush2.msra.mxu0 0.0
    %262 = vmatprep.subr.mxu0 0.0
    %263 = vmatpush2.msra.mxu0 0.0
    %264 = vmatprep.subr.mxu0 0.0
    %265 = vmatpush2.msra.mxu0 0.0
    %266 = vmatprep.subr.mxu0 0.0
    %267 = vmatpush2.msra.mxu0 0.0
    %268 = vmatprep.subr.mxu0 0.0
    %269 = vmatpush2.msra.mxu0 0.0
    %270 = vmatprep.subr.mxu0 0.0
    %271 = vmatpush2.msra.mxu0 0.0
    %272 = vmatprep.subr.mxu0 0.0
    %273 = vmatpush2.msra.mxu0 0.0
    %274 = vmatprep.subr.mxu0 0.0
    %275 = vmatpush2.msra.mxu0 0.0
    %276 = vmatprep.subr.mxu0 0.0
    %277 = vmatpush2.msra.mxu0 0.0
    %278 = vmatprep.subr.mxu0 0.0
    %279 = vmatpush2.msra.mxu0 0.0
    %280 = vmatprep.subr.mxu0 0.0
    %281 = vmatpush2.msra.mxu0 0.0
    %282 = vmatprep.subr.mxu0 0.0
    %283 = vmatpush2.msra.mxu0 0.0
    %284 = vmatprep.mubr.f32.mxu0 0.0
    %285 = vmatmul.mubr.f32.gmra.mxu0 %v209
    %v286 = vpop.f32.mrf.mxu0
    %v287 = vadd.f32 %v190, %v286
    %v288 = vpop.f32.mrf.mxu0
    %289 = vmatprep.mubr.f32.mxu0 0.0
    %290 = vmatmul.mubr.f32.gmra.mxu0 %v212
    %v291 = vpop.f32.mrf.mxu0
    %v292 = vadd.f32 %v195, %v291
    %v293 = vpop.f32.mrf.mxu0
    %294 = vmatprep.mubr.f32.mxu0 0.0
    %295 = vmatmul.mubr.f32.gmra.mxu0 %v215
    %v296 = vpop.f32.mrf.mxu0
    %v297 = vadd.f32 %v200, %v296
    %v298 = vpop.f32.mrf.mxu0
    %299 = vmatprep.mubr.f32.mxu0 0.0
    %300 = vmatmul.mubr.f32.gmra.mxu0 %v218
    %v301 = vpop.f32.mrf.mxu0
    %v302 = vadd.f32 %v205, %v301
    %v303 = vpop.f32.mrf.mxu0
    %304 = vdwg.mxu0
    %v305 = vld [vmem:[#allocation2 + $0x9] sm:$0xff]
    %v306 = vld [vmem:[#allocation2 + $0x11] sm:$0xff]
    %v307 = vld [vmem:[#allocation2 + $0x29] sm:$0xff]
    %v308 = vld [vmem:[#allocation2 + $0x31] sm:$0xff]
    %s309 = scalar_lea.vmem [#allocation7], 128
    %v310 = vld [vmem:[%s309] sm:$0xff]
    %v311 = vld [vmem:[%s309 + $0x8] sm:$0xff]
    %v312 = vld [vmem:[%s309 + $0x10] sm:$0xff]
    %v313 = vld [vmem:[%s309 + $0x18] sm:$0xff]
    %v314 = vld [vmem:[%s309 + $0x20] sm:$0xff]
    %v315 = vld [vmem:[%s309 + $0x28] sm:$0xff]
    %v316 = vld [vmem:[%s309 + $0x30] sm:$0xff]
    %v317 = vld [vmem:[%s309 + $0x38] sm:$0xff]
    %v319 = vsel %vm72, %v305, 0
    %v322 = vsel %vm72, %v306, 0
    %v325 = vsel %vm72, %v307, 0
    %v328 = vsel %vm72, %v308, 0
    %330 = vmatprep.subr.mxu0 0.0
    %331 = vmatpush1.msra.mxu0 0.0
    %332 = vmatprep.subr.mxu0 0.0
    %333 = vmatpush1.msra.mxu0 0.0
    %334 = vmatprep.subr.mxu0 0.0
    %335 = vmatpush1.msra.mxu0 0.0
    %336 = vmatprep.subr.mxu0 0.0
    %337 = vmatpush1.msra.mxu0 0.0
    %338 = vmatprep.subr.mxu0 0.0
    %339 = vmatpush1.msra.mxu0 0.0
    %340 = vmatprep.subr.mxu0 0.0
    %341 = vmatpush1.msra.mxu0 0.0
    %342 = vmatprep.subr.mxu0 0.0
    %343 = vmatpush1.msra.mxu0 0.0
    %344 = vmatprep.subr.mxu0 0.0
    %345 = vmatpush1.msra.mxu0 0.0
    %346 = vmatprep.subr.mxu0 0.0
    %347 = vmatpush1.msra.mxu0 %v317
    %348 = vmatprep.subr.mxu0 0.0
    %349 = vmatpush1.msra.mxu0 %v316
    %350 = vmatprep.subr.mxu0 0.0
    %351 = vmatpush1.msra.mxu0 %v315
    %352 = vmatprep.subr.mxu0 0.0
    %353 = vmatpush1.msra.mxu0 %v314
    %354 = vmatprep.subr.mxu0 0.0
    %355 = vmatpush1.msra.mxu0 %v313
    %356 = vmatprep.subr.mxu0 0.0
    %357 = vmatpush1.msra.mxu0 %v312
    %358 = vmatprep.subr.mxu0 0.0
    %359 = vmatpush1.msra.mxu0 %v311
    %360 = vmatprep.subr.mxu0 0.0
    %361 = vmatpush1.msra.mxu0 %v310
    %362 = vmatprep.subr.mxu0 0.0
    %363 = vmatpush2.msra.mxu0 0.0
    %364 = vmatprep.subr.mxu0 0.0
    %365 = vmatpush2.msra.mxu0 0.0
    %366 = vmatprep.subr.mxu0 0.0
    %367 = vmatpush2.msra.mxu0 0.0
    %368 = vmatprep.subr.mxu0 0.0
    %369 = vmatpush2.msra.mxu0 0.0
    %370 = vmatprep.subr.mxu0 0.0
    %371 = vmatpush2.msra.mxu0 0.0
    %372 = vmatprep.subr.mxu0 0.0
    %373 = vmatpush2.msra.mxu0 0.0
    %374 = vmatprep.subr.mxu0 0.0
    %375 = vmatpush2.msra.mxu0 0.0
    %376 = vmatprep.subr.mxu0 0.0
    %377 = vmatpush2.msra.mxu0 0.0
    %378 = vmatprep.subr.mxu0 0.0
    %379 = vmatpush2.msra.mxu0 0.0
    %380 = vmatprep.subr.mxu0 0.0
    %381 = vmatpush2.msra.mxu0 0.0
    %382 = vmatprep.subr.mxu0 0.0
    %383 = vmatpush2.msra.mxu0 0.0
    %384 = vmatprep.subr.mxu0 0.0
    %385 = vmatpush2.msra.mxu0 0.0
    %386 = vmatprep.subr.mxu0 0.0
    %387 = vmatpush2.msra.mxu0 0.0
    %388 = vmatprep.subr.mxu0 0.0
    %389 = vmatpush2.msra.mxu0 0.0
    %390 = vmatprep.subr.mxu0 0.0
    %391 = vmatpush2.msra.mxu0 0.0
    %392 = vmatprep.subr.mxu0 0.0
    %393 = vmatpush2.msra.mxu0 0.0
    %394 = vmatprep.mubr.f32.mxu0 0.0
    %395 = vmatmul.mubr.f32.gmra.mxu0 %v319
    %v396 = vpop.f32.mrf.mxu0
    %v397 = vadd.f32 0.0, %v396
    %v398 = vpop.f32.mrf.mxu0
    %399 = vmatprep.mubr.f32.mxu0 0.0
    %400 = vmatmul.mubr.f32.gmra.mxu0 %v322
    %v401 = vpop.f32.mrf.mxu0
    %v402 = vadd.f32 0.0, %v401
    %v403 = vpop.f32.mrf.mxu0
    %404 = vmatprep.mubr.f32.mxu0 0.0
    %405 = vmatmul.mubr.f32.gmra.mxu0 %v325
    %v406 = vpop.f32.mrf.mxu0
    %v407 = vadd.f32 0.0, %v406
    %v408 = vpop.f32.mrf.mxu0
    %409 = vmatprep.mubr.f32.mxu0 0.0
    %410 = vmatmul.mubr.f32.gmra.mxu0 %v328
    %v411 = vpop.f32.mrf.mxu0
    %v412 = vadd.f32 0.0, %v411
    %v413 = vpop.f32.mrf.mxu0
    %414 = vdwg.mxu0
    %v415 = vadd.f32 %v287, %v397
    %v416 = vadd.f32 %v292, %v402
    %v417 = vadd.f32 %v297, %v407
    %v418 = vadd.f32 %v302, %v412
    %v419 = vlaneseq
    %v420 = vshrl.u32 %v419, 7
    %v421 = vadd.s32 %v420, 8
    %v422 = vadd.s32 %v420, 16
    %v423 = vadd.s32 %v420, 24
    %v424 = vadd.s32 %v420, 32
    %v425 = vadd.s32 %v420, 40
    %v426 = vadd.s32 %v420, 48
    %v427 = vadd.s32 %v420, 56
    %v428 = vadd.s32 %v420, 64
    %v429 = vadd.s32 %v420, 72
    %v430 = vadd.s32 %v420, 80
    %v431 = vadd.s32 %v420, 88
    %v432 = vadd.s32 %v420, 96
    %v433 = vadd.s32 %v420, 104
    %v434 = vadd.s32 %v420, 112
    %v435 = vadd.s32 %v420, 120
    %v436 = vlaneseq
    %v437 = vand.u32 %v436, 127
    %vm438 = vcmp.lt.s32.totalorder %v420, 0
    %v439 = vsub.s32 0, %v420
    %v440 = vsel %vm438, %v439, %v420
    %v441 = vshrl.u32 %v440, 3
    %v442 = vand.u32 %v440, 7
    %v443 = vsub.s32 0, %v442
    %v444 = vsel %vm438, %v443, %v442
    %vm445 = vcmp.lt.s32.totalorder %v421, 0
    %v446 = vsub.s32 0, %v421
    %v447 = vsel %vm445, %v446, %v421
    %v448 = vshrl.u32 %v447, 3
    %v449 = vand.u32 %v447, 7
    %v450 = vsub.s32 0, %v449
    %v451 = vsel %vm445, %v450, %v449
    %vm452 = vcmp.lt.s32.totalorder %v422, 0
    %v453 = vsub.s32 0, %v422
    %v454 = vsel %vm452, %v453, %v422
    %v455 = vshrl.u32 %v454, 3
    %v456 = vand.u32 %v454, 7
    %v457 = vsub.s32 0, %v456
    %v458 = vsel %vm452, %v457, %v456
    %vm459 = vcmp.lt.s32.totalorder %v423, 0
    %v460 = vsub.s32 0, %v423
    %v461 = vsel %vm459, %v460, %v423
    %v462 = vshrl.u32 %v461, 3
    %v463 = vand.u32 %v461, 7
    %v464 = vsub.s32 0, %v463
    %v465 = vsel %vm459, %v464, %v463
    %vm466 = vcmp.lt.s32.totalorder %v424, 0
    %v467 = vsub.s32 0, %v424
    %v468 = vsel %vm466, %v467, %v424
    %v469 = vshrl.u32 %v468, 3
    %v470 = vand.u32 %v468, 7
    %v471 = vsub.s32 0, %v470
    %v472 = vsel %vm466, %v471, %v470
    %vm473 = vcmp.lt.s32.totalorder %v425, 0
    %v474 = vsub.s32 0, %v425
    %v475 = vsel %vm473, %v474, %v425
    %v476 = vshrl.u32 %v475, 3
    %v477 = vand.u32 %v475, 7
    %v478 = vsub.s32 0, %v477
    %v479 = vsel %vm473, %v478, %v477
    %vm480 = vcmp.lt.s32.totalorder %v426, 0
    %v481 = vsub.s32 0, %v426
    %v482 = vsel %vm480, %v481, %v426
    %v483 = vshrl.u32 %v482, 3
    %v484 = vand.u32 %v482, 7
    %v485 = vsub.s32 0, %v484
    %v486 = vsel %vm480, %v485, %v484
    %vm487 = vcmp.lt.s32.totalorder %v427, 0
    %v488 = vsub.s32 0, %v427
    %v489 = vsel %vm487, %v488, %v427
    %v490 = vshrl.u32 %v489, 3
    %v491 = vand.u32 %v489, 7
    %v492 = vsub.s32 0, %v491
    %v493 = vsel %vm487, %v492, %v491
    %vm494 = vcmp.lt.s32.totalorder %v428, 0
    %v495 = vsub.s32 0, %v428
    %v496 = vsel %vm494, %v495, %v428
    %v497 = vshrl.u32 %v496, 3
    %v498 = vand.u32 %v496, 7
    %v499 = vsub.s32 0, %v498
    %v500 = vsel %vm494, %v499, %v498
    %vm501 = vcmp.lt.s32.totalorder %v429, 0
    %v502 = vsub.s32 0, %v429
    %v503 = vsel %vm501, %v502, %v429
    %v504 = vshrl.u32 %v503, 3
    %v505 = vand.u32 %v503, 7
    %v506 = vsub.s32 0, %v505
    %v507 = vsel %vm501, %v506, %v505
    %vm508 = vcmp.lt.s32.totalorder %v430, 0
    %v509 = vsub.s32 0, %v430
    %v510 = vsel %vm508, %v509, %v430
    %v511 = vshrl.u32 %v510, 3
    %v512 = vand.u32 %v510, 7
    %v513 = vsub.s32 0, %v512
    %v514 = vsel %vm508, %v513, %v512
    %vm515 = vcmp.lt.s32.totalorder %v431, 0
    %v516 = vsub.s32 0, %v431
    %v517 = vsel %vm515, %v516, %v431
    %v518 = vshrl.u32 %v517, 3
    %v519 = vand.u32 %v517, 7
    %v520 = vsub.s32 0, %v519
    %v521 = vsel %vm515, %v520, %v519
    %vm522 = vcmp.lt.s32.totalorder %v432, 0
    %v523 = vsub.s32 0, %v432
    %v524 = vsel %vm522, %v523, %v432
    %v525 = vshrl.u32 %v524, 3
    %v526 = vand.u32 %v524, 7
    %v527 = vsub.s32 0, %v526
    %v528 = vsel %vm522, %v527, %v526
    %vm529 = vcmp.lt.s32.totalorder %v433, 0
    %v530 = vsub.s32 0, %v433
    %v531 = vsel %vm529, %v530, %v433
    %v532 = vshrl.u32 %v531, 3
    %v533 = vand.u32 %v531, 7
    %v534 = vsub.s32 0, %v533
    %v535 = vsel %vm529, %v534, %v533
    %vm536 = vcmp.lt.s32.totalorder %v434, 0
    %v537 = vsub.s32 0, %v434
    %v538 = vsel %vm536, %v537, %v434
    %v539 = vshrl.u32 %v538, 3
    %v540 = vand.u32 %v538, 7
    %v541 = vsub.s32 0, %v540
    %v542 = vsel %vm536, %v541, %v540
    %vm543 = vcmp.lt.s32.totalorder %v435, 0
    %v544 = vsub.s32 0, %v435
    %v545 = vsel %vm543, %v544, %v435
    %v546 = vshrl.u32 %v545, 3
    %v547 = vand.u32 %v545, 7
    %v548 = vsub.s32 0, %v547
    %v549 = vsel %vm543, %v548, %v547
    %vm550 = vcmp.ne.s32.totalorder %v444, 0
    %vm551 = vcmp.ne.s32.totalorder %v451, 0
    %vm552 = vcmp.ne.s32.totalorder %v458, 0
    %vm553 = vcmp.ne.s32.totalorder %v465, 0
    %vm554 = vcmp.ne.s32.totalorder %v472, 0
    %vm555 = vcmp.ne.s32.totalorder %v479, 0
    %vm556 = vcmp.ne.s32.totalorder %v486, 0
    %vm557 = vcmp.ne.s32.totalorder %v493, 0
    %vm558 = vcmp.ne.s32.totalorder %v500, 0
    %vm559 = vcmp.ne.s32.totalorder %v507, 0
    %vm560 = vcmp.ne.s32.totalorder %v514, 0
    %vm561 = vcmp.ne.s32.totalorder %v521, 0
    %vm562 = vcmp.ne.s32.totalorder %v528, 0
    %vm563 = vcmp.ne.s32.totalorder %v535, 0
    %vm564 = vcmp.ne.s32.totalorder %v542, 0
    %vm565 = vcmp.ne.s32.totalorder %v549, 0
    %vm566 = vcmp.lt.s32.totalorder %v444, 0
    %vm567 = vcmp.lt.s32.totalorder %v451, 0
    %vm568 = vcmp.lt.s32.totalorder %v458, 0
    %vm569 = vcmp.lt.s32.totalorder %v465, 0
    %vm570 = vcmp.lt.s32.totalorder %v472, 0
    %vm571 = vcmp.lt.s32.totalorder %v479, 0
    %vm572 = vcmp.lt.s32.totalorder %v486, 0
    %vm573 = vcmp.lt.s32.totalorder %v493, 0
    %vm574 = vcmp.lt.s32.totalorder %v500, 0
    %vm575 = vcmp.lt.s32.totalorder %v507, 0
    %vm576 = vcmp.lt.s32.totalorder %v514, 0
    %vm577 = vcmp.lt.s32.totalorder %v521, 0
    %vm578 = vcmp.lt.s32.totalorder %v528, 0
    %vm579 = vcmp.lt.s32.totalorder %v535, 0
    %vm580 = vcmp.lt.s32.totalorder %v542, 0
    %vm581 = vcmp.lt.s32.totalorder %v549, 0
    %vm582 = vmand %vm566, %vm550
    %vm583 = vmand %vm567, %vm551
    %vm584 = vmand %vm568, %vm552
    %vm585 = vmand %vm569, %vm553
    %vm586 = vmand %vm570, %vm554
    %vm587 = vmand %vm571, %vm555
    %vm588 = vmand %vm572, %vm556
    %vm589 = vmand %vm573, %vm557
    %vm590 = vmand %vm574, %vm558
    %vm591 = vmand %vm575, %vm559
    %vm592 = vmand %vm576, %vm560
    %vm593 = vmand %vm577, %vm561
    %vm594 = vmand %vm578, %vm562
    %vm595 = vmand %vm579, %vm563
    %vm596 = vmand %vm580, %vm564
    %vm597 = vmand %vm581, %vm565
    %v598 = vadd.s32 %v444, 8
    %v599 = vadd.s32 %v451, 8
    %v600 = vadd.s32 %v458, 8
    %v601 = vadd.s32 %v465, 8
    %v602 = vadd.s32 %v472, 8
    %v603 = vadd.s32 %v479, 8
    %v604 = vadd.s32 %v486, 8
    %v605 = vadd.s32 %v493, 8
    %v606 = vadd.s32 %v500, 8
    %v607 = vadd.s32 %v507, 8
    %v608 = vadd.s32 %v514, 8
    %v609 = vadd.s32 %v521, 8
    %v610 = vadd.s32 %v528, 8
    %v611 = vadd.s32 %v535, 8
    %v612 = vadd.s32 %v542, 8
    %v613 = vadd.s32 %v549, 8
    %v614 = vsel %vm582, %v598, %v444
    %v615 = vsel %vm583, %v599, %v451
    %v616 = vsel %vm584, %v600, %v458
    %v617 = vsel %vm585, %v601, %v465
    %v618 = vsel %vm586, %v602, %v472
    %v619 = vsel %vm587, %v603, %v479
    %v620 = vsel %vm588, %v604, %v486
    %v621 = vsel %vm589, %v605, %v493
    %v622 = vsel %vm590, %v606, %v500
    %v623 = vsel %vm591, %v607, %v507
    %v624 = vsel %vm592, %v608, %v514
    %v625 = vsel %vm593, %v609, %v521
    %v626 = vsel %vm594, %v610, %v528
    %v627 = vsel %vm595, %v611, %v535
    %v628 = vsel %vm596, %v612, %v542
    %v629 = vsel %vm597, %v613, %v549
    %vm630 = vcmp.eq.s32.totalorder %v614, %v437
    %vm631 = vcmp.eq.s32.totalorder %v615, %v437
    %vm632 = vcmp.eq.s32.totalorder %v616, %v437
    %vm633 = vcmp.eq.s32.totalorder %v617, %v437
    %vm634 = vcmp.eq.s32.totalorder %v618, %v437
    %vm635 = vcmp.eq.s32.totalorder %v619, %v437
    %vm636 = vcmp.eq.s32.totalorder %v620, %v437
    %vm637 = vcmp.eq.s32.totalorder %v621, %v437
    %vm638 = vcmp.eq.s32.totalorder %v622, %v437
    %vm639 = vcmp.eq.s32.totalorder %v623, %v437
    %vm640 = vcmp.eq.s32.totalorder %v624, %v437
    %vm641 = vcmp.eq.s32.totalorder %v625, %v437
    %vm642 = vcmp.eq.s32.totalorder %v626, %v437
    %vm643 = vcmp.eq.s32.totalorder %v627, %v437
    %vm644 = vcmp.eq.s32.totalorder %v628, %v437
    %vm645 = vcmp.eq.s32.totalorder %v629, %v437
    %v646 = vsel %vm630, 1.0, 0.0
    %v647 = vsel %vm631, 1.0, 0.0
    %v648 = vsel %vm632, 1.0, 0.0
    %v649 = vsel %vm633, 1.0, 0.0
    %v650 = vsel %vm634, 1.0, 0.0
    %v651 = vsel %vm635, 1.0, 0.0
    %v652 = vsel %vm636, 1.0, 0.0
    %v653 = vsel %vm637, 1.0, 0.0
    %v654 = vsel %vm638, 1.0, 0.0
    %v655 = vsel %vm639, 1.0, 0.0
    %v656 = vsel %vm640, 1.0, 0.0
    %v657 = vsel %vm641, 1.0, 0.0
    %v658 = vsel %vm642, 1.0, 0.0
    %v659 = vsel %vm643, 1.0, 0.0
    %v660 = vsel %vm644, 1.0, 0.0
    %v661 = vsel %vm645, 1.0, 0.0
    %vm662 = vcmp.lt.s32.totalorder %v437, 0
    %v663 = vsub.s32 0, %v437
    %v664 = vsel %vm662, %v663, %v437
    %v665 = vshrl.u32 %v664, 3
    %v666 = vand.u32 %v664, 7
    %v667 = vsub.s32 0, %v666
    %v668 = vsel %vm662, %v667, %v666
    %vm669 = vcmp.ne.s32.totalorder %v668, 0
    %vm670 = vcmp.lt.s32.totalorder %v668, 0
    %vm671 = vmand %vm670, %vm669
    %v672 = vadd.s32 %v668, 8
    %v673 = vsel %vm671, %v672, %v668
    %vm674 = vcmp.eq.s32.totalorder %v673, %v420
    %v675 = vsel %vm674, 1.0, 0.0
    %v676 = vadd.f32 %v415, %v416
    %v677 = vadd.f32 %v676, %v417
    %v678 = vadd.f32 %v677, %v418
    %v679 = vrot.slane %v678, 4
    %v680 = vadd.f32 %v678, %v679
    %v681 = vrot.slane %v680, 2
    %v682 = vadd.f32 %v680, %v681
    %v683 = vrot.slane %v682, 1
    %v684 = vadd.f32 %v682, %v683
    %v685 = vmul.f32 %v415, %v415
    %v686 = vmul.f32 %v416, %v416
    %v687 = vmul.f32 %v417, %v417
    %v688 = vmul.f32 %v418, %v418
    %v689 = vadd.f32 %v685, %v686
    %v690 = vadd.f32 %v689, %v687
    %v691 = vadd.f32 %v690, %v688
    %v692 = vrot.slane %v691, 4
    %v693 = vadd.f32 %v691, %v692
    %v694 = vrot.slane %v693, 2
    %v695 = vadd.f32 %v693, %v694
    %v696 = vrot.slane %v695, 1
    %v697 = vadd.f32 %v695, %v696
    %698 = vmatprep.subr.mxu0 0.0
    %699 = vmatpush1.msra.mxu0 %v661
    %700 = vmatprep.subr.mxu0 0.0
    %701 = vmatpush1.msra.mxu0 %v660
    %702 = vmatprep.subr.mxu0 0.0
    %703 = vmatpush1.msra.mxu0 %v659
    %704 = vmatprep.subr.mxu0 0.0
    %705 = vmatpush1.msra.mxu0 %v658
    %706 = vmatprep.subr.mxu0 0.0
    %707 = vmatpush1.msra.mxu0 %v657
    %708 = vmatprep.subr.mxu0 0.0
    %709 = vmatpush1.msra.mxu0 %v656
    %710 = vmatprep.subr.mxu0 0.0
    %711 = vmatpush1.msra.mxu0 %v655
    %712 = vmatprep.subr.mxu0 0.0
    %713 = vmatpush1.msra.mxu0 %v654
    %714 = vmatprep.subr.mxu0 0.0
    %715 = vmatpush1.msra.mxu0 %v653
    %716 = vmatprep.subr.mxu0 0.0
    %717 = vmatpush1.msra.mxu0 %v652
    %718 = vmatprep.subr.mxu0 0.0
    %719 = vmatpush1.msra.mxu0 %v651
    %720 = vmatprep.subr.mxu0 0.0
    %721 = vmatpush1.msra.mxu0 %v650
    %722 = vmatprep.subr.mxu0 0.0
    %723 = vmatpush1.msra.mxu0 %v649
    %724 = vmatprep.subr.mxu0 0.0
    %725 = vmatpush1.msra.mxu0 %v648
    %726 = vmatprep.subr.mxu0 0.0
    %727 = vmatpush1.msra.mxu0 %v647
    %728 = vmatprep.subr.mxu0 0.0
    %729 = vmatpush1.msra.mxu0 %v646
    %730 = vmatprep.subr.mxu0 0.0
    %731 = vmatpush2.msra.mxu0 0.0
    %732 = vmatprep.subr.mxu0 0.0
    %733 = vmatpush2.msra.mxu0 0.0
    %734 = vmatprep.subr.mxu0 0.0
    %735 = vmatpush2.msra.mxu0 0.0
    %736 = vmatprep.subr.mxu0 0.0
    %737 = vmatpush2.msra.mxu0 0.0
    %738 = vmatprep.subr.mxu0 0.0
    %739 = vmatpush2.msra.mxu0 0.0
    %740 = vmatprep.subr.mxu0 0.0
    %741 = vmatpush2.msra.mxu0 0.0
    %742 = vmatprep.subr.mxu0 0.0
    %743 = vmatpush2.msra.mxu0 0.0
    %744 = vmatprep.subr.mxu0 0.0
    %745 = vmatpush2.msra.mxu0 0.0
    %746 = vmatprep.subr.mxu0 0.0
    %747 = vmatpush2.msra.mxu0 0.0
    %748 = vmatprep.subr.mxu0 0.0
    %749 = vmatpush2.msra.mxu0 0.0
    %750 = vmatprep.subr.mxu0 0.0
    %751 = vmatpush2.msra.mxu0 0.0
    %752 = vmatprep.subr.mxu0 0.0
    %753 = vmatpush2.msra.mxu0 0.0
    %754 = vmatprep.subr.mxu0 0.0
    %755 = vmatpush2.msra.mxu0 0.0
    %756 = vmatprep.subr.mxu0 0.0
    %757 = vmatpush2.msra.mxu0 0.0
    %758 = vmatprep.subr.mxu0 0.0
    %759 = vmatpush2.msra.mxu0 0.0
    %760 = vmatprep.subr.mxu0 0.0
    %761 = vmatpush2.msra.mxu0 0.0
    %762 = vmatprep.mubr.f32.mxu0 0.0
    %763 = vmatmul.mubr.f32.gmra.mxu0 %v684
    %v764 = vpop.f32.mrf.mxu0
    %v765 = vadd.f32 0.0, %v764
    %v766 = vpop.f32.mrf.mxu0
    %767 = vdwg.mxu0
    %768 = vmatprep.subr.mxu0 0.0
    %769 = vmatpush1.msra.mxu0 %v661
    %770 = vmatprep.subr.mxu0 0.0
    %771 = vmatpush1.msra.mxu0 %v660
    %772 = vmatprep.subr.mxu0 0.0
    %773 = vmatpush1.msra.mxu0 %v659
    %774 = vmatprep.subr.mxu0 0.0
    %775 = vmatpush1.msra.mxu0 %v658
    %776 = vmatprep.subr.mxu0 0.0
    %777 = vmatpush1.msra.mxu0 %v657
    %778 = vmatprep.subr.mxu0 0.0
    %779 = vmatpush1.msra.mxu0 %v656
    %780 = vmatprep.subr.mxu0 0.0
    %781 = vmatpush1.msra.mxu0 %v655
    %782 = vmatprep.subr.mxu0 0.0
    %783 = vmatpush1.msra.mxu0 %v654
    %784 = vmatprep.subr.mxu0 0.0
    %785 = vmatpush1.msra.mxu0 %v653
    %786 = vmatprep.subr.mxu0 0.0
    %787 = vmatpush1.msra.mxu0 %v652
    %788 = vmatprep.subr.mxu0 0.0
    %789 = vmatpush1.msra.mxu0 %v651
    %790 = vmatprep.subr.mxu0 0.0
    %791 = vmatpush1.msra.mxu0 %v650
    %792 = vmatprep.subr.mxu0 0.0
    %793 = vmatpush1.msra.mxu0 %v649
    %794 = vmatprep.subr.mxu0 0.0
    %795 = vmatpush1.msra.mxu0 %v648
    %796 = vmatprep.subr.mxu0 0.0
    %797 = vmatpush1.msra.mxu0 %v647
    %798 = vmatprep.subr.mxu0 0.0
    %799 = vmatpush1.msra.mxu0 %v646
    %800 = vmatprep.subr.mxu0 0.0
    %801 = vmatpush2.msra.mxu0 0.0
    %802 = vmatprep.subr.mxu0 0.0
    %803 = vmatpush2.msra.mxu0 0.0
    %804 = vmatprep.subr.mxu0 0.0
    %805 = vmatpush2.msra.mxu0 0.0
    %806 = vmatprep.subr.mxu0 0.0
    %807 = vmatpush2.msra.mxu0 0.0
    %808 = vmatprep.subr.mxu0 0.0
    %809 = vmatpush2.msra.mxu0 0.0
    %810 = vmatprep.subr.mxu0 0.0
    %811 = vmatpush2.msra.mxu0 0.0
    %812 = vmatprep.subr.mxu0 0.0
    %813 = vmatpush2.msra.mxu0 0.0
    %814 = vmatprep.subr.mxu0 0.0
    %815 = vmatpush2.msra.mxu0 0.0
    %816 = vmatprep.subr.mxu0 0.0
    %817 = vmatpush2.msra.mxu0 0.0
    %818 = vmatprep.subr.mxu0 0.0
    %819 = vmatpush2.msra.mxu0 0.0
    %820 = vmatprep.subr.mxu0 0.0
    %821 = vmatpush2.msra.mxu0 0.0
    %822 = vmatprep.subr.mxu0 0.0
    %823 = vmatpush2.msra.mxu0 0.0
    %824 = vmatprep.subr.mxu0 0.0
    %825 = vmatpush2.msra.mxu0 0.0
    %826 = vmatprep.subr.mxu0 0.0
    %827 = vmatpush2.msra.mxu0 0.0
    %828 = vmatprep.subr.mxu0 0.0
    %829 = vmatpush2.msra.mxu0 0.0
    %830 = vmatprep.subr.mxu0 0.0
    %831 = vmatpush2.msra.mxu0 0.0
    %832 = vmatprep.mubr.f32.mxu0 0.0
    %833 = vmatmul.mubr.f32.gmra.mxu0 %v697
    %v834 = vpop.f32.mrf.mxu0
    %v835 = vadd.f32 0.0, %v834
    %v836 = vpop.f32.mrf.mxu0
    %837 = vdwg.mxu0
    %v838 = vrcp.pop 512.0
    %v839 = vmul.f32 %v765, %v838
    %v840 = vmul.f32 %v835, %v838
    %v841 = vmul.f32 %v839, %v839
    %v842 = vsub.f32 %v840, %v841
    %v843 = vld [vmem:[%s2] sm:$0x1]
    %v844 = vadd.f32 %v842, 1e-05
    %v845 = vrsqrt.pop %v844
    %v846 = vmul.f32 %v843, %v845
    %v847 = vld [vmem:[%s3] sm:$0x1]
    %v848 = vmul.f32 %v839, %v846
    %v849 = vsub.f32 %v847, %v848
    %vm850 = vcmask 64512
    %v852 = vsel %vm850, %v846, 0
    %854 = vmatprep.subr.mxu0 0.0
    %855 = vmatpush1.msra.mxu0 0.0
    %856 = vmatprep.subr.mxu0 0.0
    %857 = vmatpush1.msra.mxu0 0.0
    %858 = vmatprep.subr.mxu0 0.0
    %859 = vmatpush1.msra.mxu0 0.0
    %860 = vmatprep.subr.mxu0 0.0
    %861 = vmatpush1.msra.mxu0 0.0
    %862 = vmatprep.subr.mxu0 0.0
    %863 = vmatpush1.msra.mxu0 0.0
    %864 = vmatprep.subr.mxu0 0.0
    %865 = vmatpush1.msra.mxu0 0.0
    %866 = vmatprep.subr.mxu0 0.0
    %867 = vmatpush1.msra.mxu0 0.0
    %868 = vmatprep.subr.mxu0 0.0
    %869 = vmatpush1.msra.mxu0 0.0
    %870 = vmatprep.subr.mxu0 0.0
    %871 = vmatpush1.msra.mxu0 0.0
    %872 = vmatprep.subr.mxu0 0.0
    %873 = vmatpush1.msra.mxu0 0.0
    %874 = vmatprep.subr.mxu0 0.0
    %875 = vmatpush1.msra.mxu0 0.0
    %876 = vmatprep.subr.mxu0 0.0
    %877 = vmatpush1.msra.mxu0 0.0
    %878 = vmatprep.subr.mxu0 0.0
    %879 = vmatpush1.msra.mxu0 0.0
    %880 = vmatprep.subr.mxu0 0.0
    %881 = vmatpush1.msra.mxu0 0.0
    %882 = vmatprep.subr.mxu0 0.0
    %883 = vmatpush1.msra.mxu0 0.0
    %884 = vmatprep.subr.mxu0 0.0
    %885 = vmatpush1.msra.mxu0 %v675
    %886 = vmatprep.subr.mxu0 0.0
    %887 = vmatpush2.msra.mxu0 0.0
    %888 = vmatprep.subr.mxu0 0.0
    %889 = vmatpush2.msra.mxu0 0.0
    %890 = vmatprep.subr.mxu0 0.0
    %891 = vmatpush2.msra.mxu0 0.0
    %892 = vmatprep.subr.mxu0 0.0
    %893 = vmatpush2.msra.mxu0 0.0
    %894 = vmatprep.subr.mxu0 0.0
    %895 = vmatpush2.msra.mxu0 0.0
    %896 = vmatprep.subr.mxu0 0.0
    %897 = vmatpush2.msra.mxu0 0.0
    %898 = vmatprep.subr.mxu0 0.0
    %899 = vmatpush2.msra.mxu0 0.0
    %900 = vmatprep.subr.mxu0 0.0
    %901 = vmatpush2.msra.mxu0 0.0
    %902 = vmatprep.subr.mxu0 0.0
    %903 = vmatpush2.msra.mxu0 0.0
    %904 = vmatprep.subr.mxu0 0.0
    %905 = vmatpush2.msra.mxu0 0.0
    %906 = vmatprep.subr.mxu0 0.0
    %907 = vmatpush2.msra.mxu0 0.0
    %908 = vmatprep.subr.mxu0 0.0
    %909 = vmatpush2.msra.mxu0 0.0
    %910 = vmatprep.subr.mxu0 0.0
    %911 = vmatpush2.msra.mxu0 0.0
    %912 = vmatprep.subr.mxu0 0.0
    %913 = vmatpush2.msra.mxu0 0.0
    %914 = vmatprep.subr.mxu0 0.0
    %915 = vmatpush2.msra.mxu0 0.0
    %916 = vmatprep.subr.mxu0 0.0
    %917 = vmatpush2.msra.mxu0 0.0
    %918 = vmatprep.mubr.f32.mxu0 0.0
    %919 = vmatmul.mubr.f32.gmra.mxu0 %v852
    %v920 = vpop.f32.mrf.mxu0
    %v921 = vadd.f32 0.0, %v920
    %v922 = vpop.f32.mrf.mxu0
    %923 = vdwg.mxu0
    %v925 = vsel %vm850, %v849, 0
    %927 = vmatprep.subr.mxu0 0.0
    %928 = vmatpush1.msra.mxu0 0.0
    %929 = vmatprep.subr.mxu0 0.0
    %930 = vmatpush1.msra.mxu0 0.0
    %931 = vmatprep.subr.mxu0 0.0
    %932 = vmatpush1.msra.mxu0 0.0
    %933 = vmatprep.subr.mxu0 0.0
    %934 = vmatpush1.msra.mxu0 0.0
    %935 = vmatprep.subr.mxu0 0.0
    %936 = vmatpush1.msra.mxu0 0.0
    %937 = vmatprep.subr.mxu0 0.0
    %938 = vmatpush1.msra.mxu0 0.0
    %939 = vmatprep.subr.mxu0 0.0
    %940 = vmatpush1.msra.mxu0 0.0
    %941 = vmatprep.subr.mxu0 0.0
    %942 = vmatpush1.msra.mxu0 0.0
    %943 = vmatprep.subr.mxu0 0.0
    %944 = vmatpush1.msra.mxu0 0.0
    %945 = vmatprep.subr.mxu0 0.0
    %946 = vmatpush1.msra.mxu0 0.0
    %947 = vmatprep.subr.mxu0 0.0
    %948 = vmatpush1.msra.mxu0 0.0
    %949 = vmatprep.subr.mxu0 0.0
    %950 = vmatpush1.msra.mxu0 0.0
    %951 = vmatprep.subr.mxu0 0.0
    %952 = vmatpush1.msra.mxu0 0.0
    %953 = vmatprep.subr.mxu0 0.0
    %954 = vmatpush1.msra.mxu0 0.0
    %955 = vmatprep.subr.mxu0 0.0
    %956 = vmatpush1.msra.mxu0 0.0
    %957 = vmatprep.subr.mxu0 0.0
    %958 = vmatpush1.msra.mxu0 %v675
    %959 = vmatprep.subr.mxu0 0.0
    %960 = vmatpush2.msra.mxu0 0.0
    %961 = vmatprep.subr.mxu0 0.0
    %962 = vmatpush2.msra.mxu0 0.0
    %963 = vmatprep.subr.mxu0 0.0
    %964 = vmatpush2.msra.mxu0 0.0
    %965 = vmatprep.subr.mxu0 0.0
    %966 = vmatpush2.msra.mxu0 0.0
    %967 = vmatprep.subr.mxu0 0.0
    %968 = vmatpush2.msra.mxu0 0.0
    %969 = vmatprep.subr.mxu0 0.0
    %970 = vmatpush2.msra.mxu0 0.0
    %971 = vmatprep.subr.mxu0 0.0
    %972 = vmatpush2.msra.mxu0 0.0
    %973 = vmatprep.subr.mxu0 0.0
    %974 = vmatpush2.msra.mxu0 0.0
    %975 = vmatprep.subr.mxu0 0.0
    %976 = vmatpush2.msra.mxu0 0.0
    %977 = vmatprep.subr.mxu0 0.0
    %978 = vmatpush2.msra.mxu0 0.0
    %979 = vmatprep.subr.mxu0 0.0
    %980 = vmatpush2.msra.mxu0 0.0
    %981 = vmatprep.subr.mxu0 0.0
    %982 = vmatpush2.msra.mxu0 0.0
    %983 = vmatprep.subr.mxu0 0.0
    %984 = vmatpush2.msra.mxu0 0.0
    %985 = vmatprep.subr.mxu0 0.0
    %986 = vmatpush2.msra.mxu0 0.0
    %987 = vmatprep.subr.mxu0 0.0
    %988 = vmatpush2.msra.mxu0 0.0
    %989 = vmatprep.subr.mxu0 0.0
    %990 = vmatpush2.msra.mxu0 0.0
    %991 = vmatprep.mubr.f32.mxu0 0.0
    %992 = vmatmul.mubr.f32.gmra.mxu0 %v925
    %v993 = vpop.f32.mrf.mxu0
    %v994 = vadd.f32 0.0, %v993
    %v995 = vpop.f32.mrf.mxu0
    %996 = vdwg.mxu0
    %v997 = vlaneseq
    %v998 = vshrl.u32 %v997, 7
    %v999 = vsub.s32 0, %v998
    %v1000 = vrot.slane %v921, %v999
    %v1001 = vmul.f32 %v415, %v1000
    %v1002 = vmul.f32 %v416, %v1000
    %v1003 = vmul.f32 %v417, %v1000
    %v1004 = vmul.f32 %v418, %v1000
    %v1005 = vlaneseq
    %v1006 = vshrl.u32 %v1005, 7
    %v1007 = vsub.s32 0, %v1006
    %v1008 = vrot.slane %v994, %v1007
    %v1009 = vadd.f32 %v1001, %v1008
    %v1010 = vadd.f32 %v1002, %v1008
    %v1011 = vadd.f32 %v1003, %v1008
    %v1012 = vadd.f32 %v1004, %v1008
    %v1013 = vmax.f32 %v1009, 0.0
    %v1014 = vmax.f32 %v1010, 0.0
    %v1015 = vmax.f32 %v1011, 0.0
    %v1016 = vmax.f32 %v1012, 0.0
    %1017 = vst [vmem:[#allocation3 + $0x8] sm:$0xff] %v1013
    %1018 = vst [vmem:[#allocation3 + $0x10] sm:$0xff] %v1014
    %1019 = vst [vmem:[#allocation3 + $0x28] sm:$0xff] %v1015
    %1020 = vst [vmem:[#allocation3 + $0x30] sm:$0xff] %v1016
    %v1021 = vld [vmem:[#allocation3 + $0x9] sm:$0x1]
    %v1022 = vld [vmem:[#allocation3 + $0x29] sm:$0x1]
    %1023 = vst [vmem:[#allocation3 + $0x7] sm:$0x1] %v1021
    %1024 = vst [vmem:[#allocation3 + $0x27] sm:$0x1] %v1022
    %v1025 = vld [vmem:[#allocation3 + $0x16] sm:$0x1]
    %v1026 = vld [vmem:[#allocation3 + $0x36] sm:$0x1]
    %1027 = vst [vmem:[#allocation3 + $0x18] sm:$0x1] %v1025
    %1028 = vst [vmem:[#allocation3 + $0x38] sm:$0x1] %v1026
    %v1029 = vld [vmem:[#allocation3 + $0x7] sm:$0xff]
    %v1030 = vld [vmem:[#allocation3 + $0xf] sm:$0xff]
    %v1031 = vld [vmem:[#allocation3 + $0x27] sm:$0xff]
    %v1032 = vld [vmem:[#allocation3 + $0x2f] sm:$0xff]
    %v1033 = vld [vmem:[#allocation9] sm:$0xff]
    %v1034 = vld [vmem:[#allocation9 + $0x8] sm:$0xff]
    %v1035 = vld [vmem:[#allocation9 + $0x10] sm:$0xff]
    %v1036 = vld [vmem:[#allocation9 + $0x18] sm:$0xff]
    %v1037 = vld [vmem:[#allocation9 + $0x20] sm:$0xff]
    %v1038 = vld [vmem:[#allocation9 + $0x28] sm:$0xff]
    %v1039 = vld [vmem:[#allocation9 + $0x30] sm:$0xff]
    %v1040 = vld [vmem:[#allocation9 + $0x38] sm:$0xff]
    %v1041 = vld [vmem:[#allocation9 + $0x40] sm:$0xff]
    %v1042 = vld [vmem:[#allocation9 + $0x48] sm:$0xff]
    %v1043 = vld [vmem:[#allocation9 + $0x50] sm:$0xff]
    %v1044 = vld [vmem:[#allocation9 + $0x58] sm:$0xff]
    %v1045 = vld [vmem:[#allocation9 + $0x60] sm:$0xff]
    %v1046 = vld [vmem:[#allocation9 + $0x68] sm:$0xff]
    %v1047 = vld [vmem:[#allocation9 + $0x70] sm:$0xff]
    %v1048 = vld [vmem:[#allocation9 + $0x78] sm:$0xff]
    %v1049 = vld [vmem:[#allocation3 + $0x8] sm:$0xff]
    %v1050 = vld [vmem:[#allocation3 + $0x10] sm:$0xff]
    %v1051 = vld [vmem:[#allocation3 + $0x28] sm:$0xff]
    %v1052 = vld [vmem:[#allocation3 + $0x30] sm:$0xff]
    %s1053 = scalar_lea.vmem [#allocation9], 128
    %v1054 = vld [vmem:[%s1053] sm:$0xff]
    %v1055 = vld [vmem:[%s1053 + $0x8] sm:$0xff]
    %v1056 = vld [vmem:[%s1053 + $0x10] sm:$0xff]
    %v1057 = vld [vmem:[%s1053 + $0x18] sm:$0xff]
    %v1058 = vld [vmem:[%s1053 + $0x20] sm:$0xff]
    %v1059 = vld [vmem:[%s1053 + $0x28] sm:$0xff]
    %v1060 = vld [vmem:[%s1053 + $0x30] sm:$0xff]
    %v1061 = vld [vmem:[%s1053 + $0x38] sm:$0xff]
    %v1062 = vld [vmem:[%s1053 + $0x40] sm:$0xff]
    %v1063 = vld [vmem:[%s1053 + $0x48] sm:$0xff]
    %v1064 = vld [vmem:[%s1053 + $0x50] sm:$0xff]
    %v1065 = vld [vmem:[%s1053 + $0x58] sm:$0xff]
    %v1066 = vld [vmem:[%s1053 + $0x60] sm:$0xff]
    %v1067 = vld [vmem:[%s1053 + $0x68] sm:$0xff]
    %v1068 = vld [vmem:[%s1053 + $0x70] sm:$0xff]
    %v1069 = vld [vmem:[%s1053 + $0x78] sm:$0xff]
    %1070 = vmatprep.subr.mxu0 0.0
    %1071 = vmatpush1.msra.mxu0 %v1069
    %1072 = vmatprep.subr.mxu0 0.0
    %1073 = vmatpush1.msra.mxu0 %v1068
    %1074 = vmatprep.subr.mxu0 0.0
    %1075 = vmatpush1.msra.mxu0 %v1067
    %1076 = vmatprep.subr.mxu0 0.0
    %1077 = vmatpush1.msra.mxu0 %v1066
    %1078 = vmatprep.subr.mxu0 0.0
    %1079 = vmatpush1.msra.mxu0 %v1065
    %1080 = vmatprep.subr.mxu0 0.0
    %1081 = vmatpush1.msra.mxu0 %v1064
    %1082 = vmatprep.subr.mxu0 0.0
    %1083 = vmatpush1.msra.mxu0 %v1063
    %1084 = vmatprep.subr.mxu0 0.0
    %1085 = vmatpush1.msra.mxu0 %v1062
    %1086 = vmatprep.subr.mxu0 0.0
    %1087 = vmatpush1.msra.mxu0 %v1061
    %1088 = vmatprep.subr.mxu0 0.0
    %1089 = vmatpush1.msra.mxu0 %v1060
    %1090 = vmatprep.subr.mxu0 0.0
    %1091 = vmatpush1.msra.mxu0 %v1059
    %1092 = vmatprep.subr.mxu0 0.0
    %1093 = vmatpush1.msra.mxu0 %v1058
    %1094 = vmatprep.subr.mxu0 0.0
    %1095 = vmatpush1.msra.mxu0 %v1057
    %1096 = vmatprep.subr.mxu0 0.0
    %1097 = vmatpush1.msra.mxu0 %v1056
    %1098 = vmatprep.subr.mxu0 0.0
    %1099 = vmatpush1.msra.mxu0 %v1055
    %1100 = vmatprep.subr.mxu0 0.0
    %1101 = vmatpush1.msra.mxu0 %v1054
    %1102 = vmatprep.subr.mxu0 0.0
    %1103 = vmatpush2.msra.mxu0 0.0
    %1104 = vmatprep.subr.mxu0 0.0
    %1105 = vmatpush2.msra.mxu0 0.0
    %1106 = vmatprep.subr.mxu0 0.0
    %1107 = vmatpush2.msra.mxu0 0.0
    %1108 = vmatprep.subr.mxu0 0.0
    %1109 = vmatpush2.msra.mxu0 0.0
    %1110 = vmatprep.subr.mxu0 0.0
    %1111 = vmatpush2.msra.mxu0 0.0
    %1112 = vmatprep.subr.mxu0 0.0
    %1113 = vmatpush2.msra.mxu0 0.0
    %1114 = vmatprep.subr.mxu0 0.0
    %1115 = vmatpush2.msra.mxu0 0.0
    %1116 = vmatprep.subr.mxu0 0.0
    %1117 = vmatpush2.msra.mxu0 0.0
    %1118 = vmatprep.subr.mxu0 0.0
    %1119 = vmatpush2.msra.mxu0 0.0
    %1120 = vmatprep.subr.mxu0 0.0
    %1121 = vmatpush2.msra.mxu0 0.0
    %1122 = vmatprep.subr.mxu0 0.0
    %1123 = vmatpush2.msra.mxu0 0.0
    %1124 = vmatprep.subr.mxu0 0.0
    %1125 = vmatpush2.msra.mxu0 0.0
    %1126 = vmatprep.subr.mxu0 0.0
    %1127 = vmatpush2.msra.mxu0 0.0
    %1128 = vmatprep.subr.mxu0 0.0
    %1129 = vmatpush2.msra.mxu0 0.0
    %1130 = vmatprep.subr.mxu0 0.0
    %1131 = vmatpush2.msra.mxu0 0.0
    %1132 = vmatprep.subr.mxu0 0.0
    %1133 = vmatpush2.msra.mxu0 0.0
    %1134 = vmatprep.mubr.f32.mxu0 0.0
    %1135 = vmatmul.mubr.f32.gmra.mxu0 %v1049
    %v1136 = vpop.f32.mrf.mxu0
    %v1137 = vadd.f32 0.0, %v1136
    %v1138 = vpop.f32.mrf.mxu0
    %1139 = vmatprep.mubr.f32.mxu0 0.0
    %1140 = vmatmul.mubr.f32.gmra.mxu0 %v1050
    %v1141 = vpop.f32.mrf.mxu0
    %v1142 = vadd.f32 0.0, %v1141
    %v1143 = vpop.f32.mrf.mxu0
    %1144 = vmatprep.mubr.f32.mxu0 0.0
    %1145 = vmatmul.mubr.f32.gmra.mxu0 %v1051
    %v1146 = vpop.f32.mrf.mxu0
    %v1147 = vadd.f32 0.0, %v1146
    %v1148 = vpop.f32.mrf.mxu0
    %1149 = vmatprep.mubr.f32.mxu0 0.0
    %1150 = vmatmul.mubr.f32.gmra.mxu0 %v1052
    %v1151 = vpop.f32.mrf.mxu0
    %v1152 = vadd.f32 0.0, %v1151
    %v1153 = vpop.f32.mrf.mxu0
    %1154 = vdwg.mxu0
    %1155 = vmatprep.subr.mxu0 0.0
    %1156 = vmatpush1.msra.mxu0 %v1048
    %1157 = vmatprep.subr.mxu0 0.0
    %1158 = vmatpush1.msra.mxu0 %v1047
    %1159 = vmatprep.subr.mxu0 0.0
    %1160 = vmatpush1.msra.mxu0 %v1046
    %1161 = vmatprep.subr.mxu0 0.0
    %1162 = vmatpush1.msra.mxu0 %v1045
    %1163 = vmatprep.subr.mxu0 0.0
    %1164 = vmatpush1.msra.mxu0 %v1044
    %1165 = vmatprep.subr.mxu0 0.0
    %1166 = vmatpush1.msra.mxu0 %v1043
    %1167 = vmatprep.subr.mxu0 0.0
    %1168 = vmatpush1.msra.mxu0 %v1042
    %1169 = vmatprep.subr.mxu0 0.0
    %1170 = vmatpush1.msra.mxu0 %v1041
    %1171 = vmatprep.subr.mxu0 0.0
    %1172 = vmatpush1.msra.mxu0 %v1040
    %1173 = vmatprep.subr.mxu0 0.0
    %1174 = vmatpush1.msra.mxu0 %v1039
    %1175 = vmatprep.subr.mxu0 0.0
    %1176 = vmatpush1.msra.mxu0 %v1038
    %1177 = vmatprep.subr.mxu0 0.0
    %1178 = vmatpush1.msra.mxu0 %v1037
    %1179 = vmatprep.subr.mxu0 0.0
    %1180 = vmatpush1.msra.mxu0 %v1036
    %1181 = vmatprep.subr.mxu0 0.0
    %1182 = vmatpush1.msra.mxu0 %v1035
    %1183 = vmatprep.subr.mxu0 0.0
    %1184 = vmatpush1.msra.mxu0 %v1034
    %1185 = vmatprep.subr.mxu0 0.0
    %1186 = vmatpush1.msra.mxu0 %v1033
    %1187 = vmatprep.subr.mxu0 0.0
    %1188 = vmatpush2.msra.mxu0 0.0
    %1189 = vmatprep.subr.mxu0 0.0
    %1190 = vmatpush2.msra.mxu0 0.0
    %1191 = vmatprep.subr.mxu0 0.0
    %1192 = vmatpush2.msra.mxu0 0.0
    %1193 = vmatprep.subr.mxu0 0.0
    %1194 = vmatpush2.msra.mxu0 0.0
    %1195 = vmatprep.subr.mxu0 0.0
    %1196 = vmatpush2.msra.mxu0 0.0
    %1197 = vmatprep.subr.mxu0 0.0
    %1198 = vmatpush2.msra.mxu0 0.0
    %1199 = vmatprep.subr.mxu0 0.0
    %1200 = vmatpush2.msra.mxu0 0.0
    %1201 = vmatprep.subr.mxu0 0.0
    %1202 = vmatpush2.msra.mxu0 0.0
    %1203 = vmatprep.subr.mxu0 0.0
    %1204 = vmatpush2.msra.mxu0 0.0
    %1205 = vmatprep.subr.mxu0 0.0
    %1206 = vmatpush2.msra.mxu0 0.0
    %1207 = vmatprep.subr.mxu0 0.0
    %1208 = vmatpush2.msra.mxu0 0.0
    %1209 = vmatprep.subr.mxu0 0.0
    %1210 = vmatpush2.msra.mxu0 0.0
    %1211 = vmatprep.subr.mxu0 0.0
    %1212 = vmatpush2.msra.mxu0 0.0
    %1213 = vmatprep.subr.mxu0 0.0
    %1214 = vmatpush2.msra.mxu0 0.0
    %1215 = vmatprep.subr.mxu0 0.0
    %1216 = vmatpush2.msra.mxu0 0.0
    %1217 = vmatprep.subr.mxu0 0.0
    %1218 = vmatpush2.msra.mxu0 0.0
    %1219 = vmatprep.mubr.f32.mxu0 0.0
    %1220 = vmatmul.mubr.f32.gmra.mxu0 %v1029
    %v1221 = vpop.f32.mrf.mxu0
    %v1222 = vadd.f32 %v1137, %v1221
    %v1223 = vpop.f32.mrf.mxu0
    %1224 = vmatprep.mubr.f32.mxu0 0.0
    %1225 = vmatmul.mubr.f32.gmra.mxu0 %v1030
    %v1226 = vpop.f32.mrf.mxu0
    %v1227 = vadd.f32 %v1142, %v1226
    %v1228 = vpop.f32.mrf.mxu0
    %1229 = vmatprep.mubr.f32.mxu0 0.0
    %1230 = vmatmul.mubr.f32.gmra.mxu0 %v1031
    %v1231 = vpop.f32.mrf.mxu0
    %v1232 = vadd.f32 %v1147, %v1231
    %v1233 = vpop.f32.mrf.mxu0
    %1234 = vmatprep.mubr.f32.mxu0 0.0
    %1235 = vmatmul.mubr.f32.gmra.mxu0 %v1032
    %v1236 = vpop.f32.mrf.mxu0
    %v1237 = vadd.f32 %v1152, %v1236
    %v1238 = vpop.f32.mrf.mxu0
    %1239 = vdwg.mxu0
    %v1240 = vld [vmem:[#allocation3 + $0x9] sm:$0xff]
    %v1241 = vld [vmem:[#allocation3 + $0x11] sm:$0xff]
    %v1242 = vld [vmem:[#allocation3 + $0x29] sm:$0xff]
    %v1243 = vld [vmem:[#allocation3 + $0x31] sm:$0xff]
    %s1244 = scalar_lea.vmem [#allocation9], 256
    %v1245 = vld [vmem:[%s1244] sm:$0xff]
    %v1246 = vld [vmem:[%s1244 + $0x8] sm:$0xff]
    %v1247 = vld [vmem:[%s1244 + $0x10] sm:$0xff]
    %v1248 = vld [vmem:[%s1244 + $0x18] sm:$0xff]
    %v1249 = vld [vmem:[%s1244 + $0x20] sm:$0xff]
    %v1250 = vld [vmem:[%s1244 + $0x28] sm:$0xff]
    %v1251 = vld [vmem:[%s1244 + $0x30] sm:$0xff]
    %v1252 = vld [vmem:[%s1244 + $0x38] sm:$0xff]
    %v1253 = vld [vmem:[%s1244 + $0x40] sm:$0xff]
    %v1254 = vld [vmem:[%s1244 + $0x48] sm:$0xff]
    %v1255 = vld [vmem:[%s1244 + $0x50] sm:$0xff]
    %v1256 = vld [vmem:[%s1244 + $0x58] sm:$0xff]
    %v1257 = vld [vmem:[%s1244 + $0x60] sm:$0xff]
    %v1258 = vld [vmem:[%s1244 + $0x68] sm:$0xff]
    %v1259 = vld [vmem:[%s1244 + $0x70] sm:$0xff]
    %v1260 = vld [vmem:[%s1244 + $0x78] sm:$0xff]
    %1261 = vmatprep.subr.mxu0 0.0
    %1262 = vmatpush1.msra.mxu0 %v1260
    %1263 = vmatprep.subr.mxu0 0.0
    %1264 = vmatpush1.msra.mxu0 %v1259
    %1265 = vmatprep.subr.mxu0 0.0
    %1266 = vmatpush1.msra.mxu0 %v1258
    %1267 = vmatprep.subr.mxu0 0.0
    %1268 = vmatpush1.msra.mxu0 %v1257
    %1269 = vmatprep.subr.mxu0 0.0
    %1270 = vmatpush1.msra.mxu0 %v1256
    %1271 = vmatprep.subr.mxu0 0.0
    %1272 = vmatpush1.msra.mxu0 %v1255
    %1273 = vmatprep.subr.mxu0 0.0
    %1274 = vmatpush1.msra.mxu0 %v1254
    %1275 = vmatprep.subr.mxu0 0.0
    %1276 = vmatpush1.msra.mxu0 %v1253
    %1277 = vmatprep.subr.mxu0 0.0
    %1278 = vmatpush1.msra.mxu0 %v1252
    %1279 = vmatprep.subr.mxu0 0.0
    %1280 = vmatpush1.msra.mxu0 %v1251
    %1281 = vmatprep.subr.mxu0 0.0
    %1282 = vmatpush1.msra.mxu0 %v1250
    %1283 = vmatprep.subr.mxu0 0.0
    %1284 = vmatpush1.msra.mxu0 %v1249
    %1285 = vmatprep.subr.mxu0 0.0
    %1286 = vmatpush1.msra.mxu0 %v1248
    %1287 = vmatprep.subr.mxu0 0.0
    %1288 = vmatpush1.msra.mxu0 %v1247
    %1289 = vmatprep.subr.mxu0 0.0
    %1290 = vmatpush1.msra.mxu0 %v1246
    %1291 = vmatprep.subr.mxu0 0.0
    %1292 = vmatpush1.msra.mxu0 %v1245
    %1293 = vmatprep.subr.mxu0 0.0
    %1294 = vmatpush2.msra.mxu0 0.0
    %1295 = vmatprep.subr.mxu0 0.0
    %1296 = vmatpush2.msra.mxu0 0.0
    %1297 = vmatprep.subr.mxu0 0.0
    %1298 = vmatpush2.msra.mxu0 0.0
    %1299 = vmatprep.subr.mxu0 0.0
    %1300 = vmatpush2.msra.mxu0 0.0
    %1301 = vmatprep.subr.mxu0 0.0
    %1302 = vmatpush2.msra.mxu0 0.0
    %1303 = vmatprep.subr.mxu0 0.0
    %1304 = vmatpush2.msra.mxu0 0.0
    %1305 = vmatprep.subr.mxu0 0.0
    %1306 = vmatpush2.msra.mxu0 0.0
    %1307 = vmatprep.subr.mxu0 0.0
    %1308 = vmatpush2.msra.mxu0 0.0
    %1309 = vmatprep.subr.mxu0 0.0
    %1310 = vmatpush2.msra.mxu0 0.0
    %1311 = vmatprep.subr.mxu0 0.0
    %1312 = vmatpush2.msra.mxu0 0.0
    %1313 = vmatprep.subr.mxu0 0.0
    %1314 = vmatpush2.msra.mxu0 0.0
    %1315 = vmatprep.subr.mxu0 0.0
    %1316 = vmatpush2.msra.mxu0 0.0
    %1317 = vmatprep.subr.mxu0 0.0
    %1318 = vmatpush2.msra.mxu0 0.0
    %1319 = vmatprep.subr.mxu0 0.0
    %1320 = vmatpush2.msra.mxu0 0.0
    %1321 = vmatprep.subr.mxu0 0.0
    %1322 = vmatpush2.msra.mxu0 0.0
    %1323 = vmatprep.subr.mxu0 0.0
    %1324 = vmatpush2.msra.mxu0 0.0
    %1325 = vmatprep.mubr.f32.mxu0 0.0
    %1326 = vmatmul.mubr.f32.gmra.mxu0 %v1240
    %v1327 = vpop.f32.mrf.mxu0
    %v1328 = vadd.f32 0.0, %v1327
    %v1329 = vpop.f32.mrf.mxu0
    %1330 = vmatprep.mubr.f32.mxu0 0.0
    %1331 = vmatmul.mubr.f32.gmra.mxu0 %v1241
    %v1332 = vpop.f32.mrf.mxu0
    %v1333 = vadd.f32 0.0, %v1332
    %v1334 = vpop.f32.mrf.mxu0
    %1335 = vmatprep.mubr.f32.mxu0 0.0
    %1336 = vmatmul.mubr.f32.gmra.mxu0 %v1242
    %v1337 = vpop.f32.mrf.mxu0
    %v1338 = vadd.f32 0.0, %v1337
    %v1339 = vpop.f32.mrf.mxu0
    %1340 = vmatprep.mubr.f32.mxu0 0.0
    %1341 = vmatmul.mubr.f32.gmra.mxu0 %v1243
    %v1342 = vpop.f32.mrf.mxu0
    %v1343 = vadd.f32 0.0, %v1342
    %v1344 = vpop.f32.mrf.mxu0
    %1345 = vdwg.mxu0
    %v1346 = vadd.f32 %v1222, %v1328
    %v1347 = vadd.f32 %v1227, %v1333
    %v1348 = vadd.f32 %v1232, %v1338
    %v1349 = vadd.f32 %v1237, %v1343
    %v1350 = vadd.f32 %v1346, %v1347
    %v1351 = vadd.f32 %v1350, %v1348
    %v1352 = vadd.f32 %v1351, %v1349
    %v1353 = vrot.slane %v1352, 4
    %v1354 = vadd.f32 %v1352, %v1353
    %v1355 = vrot.slane %v1354, 2
    %v1356 = vadd.f32 %v1354, %v1355
    %v1357 = vrot.slane %v1356, 1
    %v1358 = vadd.f32 %v1356, %v1357
    %v1359 = vmul.f32 %v1346, %v1346
    %v1360 = vmul.f32 %v1347, %v1347
    %v1361 = vmul.f32 %v1348, %v1348
    %v1362 = vmul.f32 %v1349, %v1349
    %v1363 = vadd.f32 %v1359, %v1360
    %v1364 = vadd.f32 %v1363, %v1361
    %v1365 = vadd.f32 %v1364, %v1362
    %v1366 = vrot.slane %v1365, 4
    %v1367 = vadd.f32 %v1365, %v1366
    %v1368 = vrot.slane %v1367, 2
    %v1369 = vadd.f32 %v1367, %v1368
    %v1370 = vrot.slane %v1369, 1
    %v1371 = vadd.f32 %v1369, %v1370
    %1372 = vmatprep.subr.mxu0 0.0
    %1373 = vmatpush1.msra.mxu0 %v661
    %1374 = vmatprep.subr.mxu0 0.0
    %1375 = vmatpush1.msra.mxu0 %v660
    %1376 = vmatprep.subr.mxu0 0.0
    %1377 = vmatpush1.msra.mxu0 %v659
    %1378 = vmatprep.subr.mxu0 0.0
    %1379 = vmatpush1.msra.mxu0 %v658
    %1380 = vmatprep.subr.mxu0 0.0
    %1381 = vmatpush1.msra.mxu0 %v657
    %1382 = vmatprep.subr.mxu0 0.0
    %1383 = vmatpush1.msra.mxu0 %v656
    %1384 = vmatprep.subr.mxu0 0.0
    %1385 = vmatpush1.msra.mxu0 %v655
    %1386 = vmatprep.subr.mxu0 0.0
    %1387 = vmatpush1.msra.mxu0 %v654
    %1388 = vmatprep.subr.mxu0 0.0
    %1389 = vmatpush1.msra.mxu0 %v653
    %1390 = vmatprep.subr.mxu0 0.0
    %1391 = vmatpush1.msra.mxu0 %v652
    %1392 = vmatprep.subr.mxu0 0.0
    %1393 = vmatpush1.msra.mxu0 %v651
    %1394 = vmatprep.subr.mxu0 0.0
    %1395 = vmatpush1.msra.mxu0 %v650
    %1396 = vmatprep.subr.mxu0 0.0
    %1397 = vmatpush1.msra.mxu0 %v649
    %1398 = vmatprep.subr.mxu0 0.0
    %1399 = vmatpush1.msra.mxu0 %v648
    %1400 = vmatprep.subr.mxu0 0.0
    %1401 = vmatpush1.msra.mxu0 %v647
    %1402 = vmatprep.subr.mxu0 0.0
    %1403 = vmatpush1.msra.mxu0 %v646
    %1404 = vmatprep.subr.mxu0 0.0
    %1405 = vmatpush2.msra.mxu0 0.0
    %1406 = vmatprep.subr.mxu0 0.0
    %1407 = vmatpush2.msra.mxu0 0.0
    %1408 = vmatprep.subr.mxu0 0.0
    %1409 = vmatpush2.msra.mxu0 0.0
    %1410 = vmatprep.subr.mxu0 0.0
    %1411 = vmatpush2.msra.mxu0 0.0
    %1412 = vmatprep.subr.mxu0 0.0
    %1413 = vmatpush2.msra.mxu0 0.0
    %1414 = vmatprep.subr.mxu0 0.0
    %1415 = vmatpush2.msra.mxu0 0.0
    %1416 = vmatprep.subr.mxu0 0.0
    %1417 = vmatpush2.msra.mxu0 0.0
    %1418 = vmatprep.subr.mxu0 0.0
    %1419 = vmatpush2.msra.mxu0 0.0
    %1420 = vmatprep.subr.mxu0 0.0
    %1421 = vmatpush2.msra.mxu0 0.0
    %1422 = vmatprep.subr.mxu0 0.0
    %1423 = vmatpush2.msra.mxu0 0.0
    %1424 = vmatprep.subr.mxu0 0.0
    %1425 = vmatpush2.msra.mxu0 0.0
    %1426 = vmatprep.subr.mxu0 0.0
    %1427 = vmatpush2.msra.mxu0 0.0
    %1428 = vmatprep.subr.mxu0 0.0
    %1429 = vmatpush2.msra.mxu0 0.0
    %1430 = vmatprep.subr.mxu0 0.0
    %1431 = vmatpush2.msra.mxu0 0.0
    %1432 = vmatprep.subr.mxu0 0.0
    %1433 = vmatpush2.msra.mxu0 0.0
    %1434 = vmatprep.subr.mxu0 0.0
    %1435 = vmatpush2.msra.mxu0 0.0
    %1436 = vmatprep.mubr.f32.mxu0 0.0
    %1437 = vmatmul.mubr.f32.gmra.mxu0 %v1358
    %v1438 = vpop.f32.mrf.mxu0
    %v1439 = vadd.f32 0.0, %v1438
    %v1440 = vpop.f32.mrf.mxu0
    %1441 = vdwg.mxu0
    %1442 = vmatprep.subr.mxu0 0.0
    %1443 = vmatpush1.msra.mxu0 %v661
    %1444 = vmatprep.subr.mxu0 0.0
    %1445 = vmatpush1.msra.mxu0 %v660
    %1446 = vmatprep.subr.mxu0 0.0
    %1447 = vmatpush1.msra.mxu0 %v659
    %1448 = vmatprep.subr.mxu0 0.0
    %1449 = vmatpush1.msra.mxu0 %v658
    %1450 = vmatprep.subr.mxu0 0.0
    %1451 = vmatpush1.msra.mxu0 %v657
    %1452 = vmatprep.subr.mxu0 0.0
    %1453 = vmatpush1.msra.mxu0 %v656
    %1454 = vmatprep.subr.mxu0 0.0
    %1455 = vmatpush1.msra.mxu0 %v655
    %1456 = vmatprep.subr.mxu0 0.0
    %1457 = vmatpush1.msra.mxu0 %v654
    %1458 = vmatprep.subr.mxu0 0.0
    %1459 = vmatpush1.msra.mxu0 %v653
    %1460 = vmatprep.subr.mxu0 0.0
    %1461 = vmatpush1.msra.mxu0 %v652
    %1462 = vmatprep.subr.mxu0 0.0
    %1463 = vmatpush1.msra.mxu0 %v651
    %1464 = vmatprep.subr.mxu0 0.0
    %1465 = vmatpush1.msra.mxu0 %v650
    %1466 = vmatprep.subr.mxu0 0.0
    %1467 = vmatpush1.msra.mxu0 %v649
    %1468 = vmatprep.subr.mxu0 0.0
    %1469 = vmatpush1.msra.mxu0 %v648
    %1470 = vmatprep.subr.mxu0 0.0
    %1471 = vmatpush1.msra.mxu0 %v647
    %1472 = vmatprep.subr.mxu0 0.0
    %1473 = vmatpush1.msra.mxu0 %v646
    %1474 = vmatprep.subr.mxu0 0.0
    %1475 = vmatpush2.msra.mxu0 0.0
    %1476 = vmatprep.subr.mxu0 0.0
    %1477 = vmatpush2.msra.mxu0 0.0
    %1478 = vmatprep.subr.mxu0 0.0
    %1479 = vmatpush2.msra.mxu0 0.0
    %1480 = vmatprep.subr.mxu0 0.0
    %1481 = vmatpush2.msra.mxu0 0.0
    %1482 = vmatprep.subr.mxu0 0.0
    %1483 = vmatpush2.msra.mxu0 0.0
    %1484 = vmatprep.subr.mxu0 0.0
    %1485 = vmatpush2.msra.mxu0 0.0
    %1486 = vmatprep.subr.mxu0 0.0
    %1487 = vmatpush2.msra.mxu0 0.0
    %1488 = vmatprep.subr.mxu0 0.0
    %1489 = vmatpush2.msra.mxu0 0.0
    %1490 = vmatprep.subr.mxu0 0.0
    %1491 = vmatpush2.msra.mxu0 0.0
    %1492 = vmatprep.subr.mxu0 0.0
    %1493 = vmatpush2.msra.mxu0 0.0
    %1494 = vmatprep.subr.mxu0 0.0
    %1495 = vmatpush2.msra.mxu0 0.0
    %1496 = vmatprep.subr.mxu0 0.0
    %1497 = vmatpush2.msra.mxu0 0.0
    %1498 = vmatprep.subr.mxu0 0.0
    %1499 = vmatpush2.msra.mxu0 0.0
    %1500 = vmatprep.subr.mxu0 0.0
    %1501 = vmatpush2.msra.mxu0 0.0
    %1502 = vmatprep.subr.mxu0 0.0
    %1503 = vmatpush2.msra.mxu0 0.0
    %1504 = vmatprep.subr.mxu0 0.0
    %1505 = vmatpush2.msra.mxu0 0.0
    %1506 = vmatprep.mubr.f32.mxu0 0.0
    %1507 = vmatmul.mubr.f32.gmra.mxu0 %v1371
    %v1508 = vpop.f32.mrf.mxu0
    %v1509 = vadd.f32 0.0, %v1508
    %v1510 = vpop.f32.mrf.mxu0
    %1511 = vdwg.mxu0
    %v1512 = vmul.f32 %v1439, %v838
    %v1513 = vmul.f32 %v1509, %v838
    %v1514 = vmul.f32 %v1512, %v1512
    %v1515 = vsub.f32 %v1513, %v1514
    %v1516 = vld [vmem:[%s5] sm:$0x1]
    %v1517 = vadd.f32 %v1515, 1e-05
    %v1518 = vrsqrt.pop %v1517
    %v1519 = vmul.f32 %v1516, %v1518
    %v1520 = vld [vmem:[%s6] sm:$0x1]
    %v1521 = vmul.f32 %v1512, %v1519
    %v1522 = vsub.f32 %v1520, %v1521
    %v1524 = vsel %vm850, %v1519, 0
    %1526 = vmatprep.subr.mxu0 0.0
    %1527 = vmatpush1.msra.mxu0 0.0
    %1528 = vmatprep.subr.mxu0 0.0
    %1529 = vmatpush1.msra.mxu0 0.0
    %1530 = vmatprep.subr.mxu0 0.0
    %1531 = vmatpush1.msra.mxu0 0.0
    %1532 = vmatprep.subr.mxu0 0.0
    %1533 = vmatpush1.msra.mxu0 0.0
    %1534 = vmatprep.subr.mxu0 0.0
    %1535 = vmatpush1.msra.mxu0 0.0
    %1536 = vmatprep.subr.mxu0 0.0
    %1537 = vmatpush1.msra.mxu0 0.0
    %1538 = vmatprep.subr.mxu0 0.0
    %1539 = vmatpush1.msra.mxu0 0.0
    %1540 = vmatprep.subr.mxu0 0.0
    %1541 = vmatpush1.msra.mxu0 0.0
    %1542 = vmatprep.subr.mxu0 0.0
    %1543 = vmatpush1.msra.mxu0 0.0
    %1544 = vmatprep.subr.mxu0 0.0
    %1545 = vmatpush1.msra.mxu0 0.0
    %1546 = vmatprep.subr.mxu0 0.0
    %1547 = vmatpush1.msra.mxu0 0.0
    %1548 = vmatprep.subr.mxu0 0.0
    %1549 = vmatpush1.msra.mxu0 0.0
    %1550 = vmatprep.subr.mxu0 0.0
    %1551 = vmatpush1.msra.mxu0 0.0
    %1552 = vmatprep.subr.mxu0 0.0
    %1553 = vmatpush1.msra.mxu0 0.0
    %1554 = vmatprep.subr.mxu0 0.0
    %1555 = vmatpush1.msra.mxu0 0.0
    %1556 = vmatprep.subr.mxu0 0.0
    %1557 = vmatpush1.msra.mxu0 %v675
    %1558 = vmatprep.subr.mxu0 0.0
    %1559 = vmatpush2.msra.mxu0 0.0
    %1560 = vmatprep.subr.mxu0 0.0
    %1561 = vmatpush2.msra.mxu0 0.0
    %1562 = vmatprep.subr.mxu0 0.0
    %1563 = vmatpush2.msra.mxu0 0.0
    %1564 = vmatprep.subr.mxu0 0.0
    %1565 = vmatpush2.msra.mxu0 0.0
    %1566 = vmatprep.subr.mxu0 0.0
    %1567 = vmatpush2.msra.mxu0 0.0
    %1568 = vmatprep.subr.mxu0 0.0
    %1569 = vmatpush2.msra.mxu0 0.0
    %1570 = vmatprep.subr.mxu0 0.0
    %1571 = vmatpush2.msra.mxu0 0.0
    %1572 = vmatprep.subr.mxu0 0.0
    %1573 = vmatpush2.msra.mxu0 0.0
    %1574 = vmatprep.subr.mxu0 0.0
    %1575 = vmatpush2.msra.mxu0 0.0
    %1576 = vmatprep.subr.mxu0 0.0
    %1577 = vmatpush2.msra.mxu0 0.0
    %1578 = vmatprep.subr.mxu0 0.0
    %1579 = vmatpush2.msra.mxu0 0.0
    %1580 = vmatprep.subr.mxu0 0.0
    %1581 = vmatpush2.msra.mxu0 0.0
    %1582 = vmatprep.subr.mxu0 0.0
    %1583 = vmatpush2.msra.mxu0 0.0
    %1584 = vmatprep.subr.mxu0 0.0
    %1585 = vmatpush2.msra.mxu0 0.0
    %1586 = vmatprep.subr.mxu0 0.0
    %1587 = vmatpush2.msra.mxu0 0.0
    %1588 = vmatprep.subr.mxu0 0.0
    %1589 = vmatpush2.msra.mxu0 0.0
    %1590 = vmatprep.mubr.f32.mxu0 0.0
    %1591 = vmatmul.mubr.f32.gmra.mxu0 %v1524
    %v1592 = vpop.f32.mrf.mxu0
    %v1593 = vadd.f32 0.0, %v1592
    %v1594 = vpop.f32.mrf.mxu0
    %1595 = vdwg.mxu0
    %v1597 = vsel %vm850, %v1522, 0
    %1599 = vmatprep.subr.mxu0 0.0
    %1600 = vmatpush1.msra.mxu0 0.0
    %1601 = vmatprep.subr.mxu0 0.0
    %1602 = vmatpush1.msra.mxu0 0.0
    %1603 = vmatprep.subr.mxu0 0.0
    %1604 = vmatpush1.msra.mxu0 0.0
    %1605 = vmatprep.subr.mxu0 0.0
    %1606 = vmatpush1.msra.mxu0 0.0
    %1607 = vmatprep.subr.mxu0 0.0
    %1608 = vmatpush1.msra.mxu0 0.0
    %1609 = vmatprep.subr.mxu0 0.0
    %1610 = vmatpush1.msra.mxu0 0.0
    %1611 = vmatprep.subr.mxu0 0.0
    %1612 = vmatpush1.msra.mxu0 0.0
    %1613 = vmatprep.subr.mxu0 0.0
    %1614 = vmatpush1.msra.mxu0 0.0
    %1615 = vmatprep.subr.mxu0 0.0
    %1616 = vmatpush1.msra.mxu0 0.0
    %1617 = vmatprep.subr.mxu0 0.0
    %1618 = vmatpush1.msra.mxu0 0.0
    %1619 = vmatprep.subr.mxu0 0.0
    %1620 = vmatpush1.msra.mxu0 0.0
    %1621 = vmatprep.subr.mxu0 0.0
    %1622 = vmatpush1.msra.mxu0 0.0
    %1623 = vmatprep.subr.mxu0 0.0
    %1624 = vmatpush1.msra.mxu0 0.0
    %1625 = vmatprep.subr.mxu0 0.0
    %1626 = vmatpush1.msra.mxu0 0.0
    %1627 = vmatprep.subr.mxu0 0.0
    %1628 = vmatpush1.msra.mxu0 0.0
    %1629 = vmatprep.subr.mxu0 0.0
    %1630 = vmatpush1.msra.mxu0 %v675
    %1631 = vmatprep.subr.mxu0 0.0
    %1632 = vmatpush2.msra.mxu0 0.0
    %1633 = vmatprep.subr.mxu0 0.0
    %1634 = vmatpush2.msra.mxu0 0.0
    %1635 = vmatprep.subr.mxu0 0.0
    %1636 = vmatpush2.msra.mxu0 0.0
    %1637 = vmatprep.subr.mxu0 0.0
    %1638 = vmatpush2.msra.mxu0 0.0
    %1639 = vmatprep.subr.mxu0 0.0
    %1640 = vmatpush2.msra.mxu0 0.0
    %1641 = vmatprep.subr.mxu0 0.0
    %1642 = vmatpush2.msra.mxu0 0.0
    %1643 = vmatprep.subr.mxu0 0.0
    %1644 = vmatpush2.msra.mxu0 0.0
    %1645 = vmatprep.subr.mxu0 0.0
    %1646 = vmatpush2.msra.mxu0 0.0
    %1647 = vmatprep.subr.mxu0 0.0
    %1648 = vmatpush2.msra.mxu0 0.0
    %1649 = vmatprep.subr.mxu0 0.0
    %1650 = vmatpush2.msra.mxu0 0.0
    %1651 = vmatprep.subr.mxu0 0.0
    %1652 = vmatpush2.msra.mxu0 0.0
    %1653 = vmatprep.subr.mxu0 0.0
    %1654 = vmatpush2.msra.mxu0 0.0
    %1655 = vmatprep.subr.mxu0 0.0
    %1656 = vmatpush2.msra.mxu0 0.0
    %1657 = vmatprep.subr.mxu0 0.0
    %1658 = vmatpush2.msra.mxu0 0.0
    %1659 = vmatprep.subr.mxu0 0.0
    %1660 = vmatpush2.msra.mxu0 0.0
    %1661 = vmatprep.subr.mxu0 0.0
    %1662 = vmatpush2.msra.mxu0 0.0
    %1663 = vmatprep.mubr.f32.mxu0 0.0
    %1664 = vmatmul.mubr.f32.gmra.mxu0 %v1597
    %v1665 = vpop.f32.mrf.mxu0
    %v1666 = vadd.f32 0.0, %v1665
    %v1667 = vpop.f32.mrf.mxu0
    %1668 = vdwg.mxu0
    %v1669 = vlaneseq
    %v1670 = vshrl.u32 %v1669, 7
    %v1671 = vsub.s32 0, %v1670
    %v1672 = vrot.slane %v1593, %v1671
    %v1673 = vmul.f32 %v1346, %v1672
    %v1674 = vmul.f32 %v1347, %v1672
    %v1675 = vmul.f32 %v1348, %v1672
    %v1676 = vmul.f32 %v1349, %v1672
    %v1677 = vlaneseq
    %v1678 = vshrl.u32 %v1677, 7
    %v1679 = vsub.s32 0, %v1678
    %v1680 = vrot.slane %v1666, %v1679
    %v1681 = vadd.f32 %v1673, %v1680
    %v1682 = vadd.f32 %v1674, %v1680
    %v1683 = vadd.f32 %v1675, %v1680
    %v1684 = vadd.f32 %v1676, %v1680
    %v1685 = vmax.f32 %v1681, 0.0
    %v1686 = vmax.f32 %v1682, 0.0
    %v1687 = vmax.f32 %v1683, 0.0
    %v1688 = vmax.f32 %v1684, 0.0
    %1689 = vst [vmem:[#allocation10] sm:$0xff] %v1685
    %1690 = vst [vmem:[#allocation10 + $0x8] sm:$0xff] %v1686
    %1691 = vst [vmem:[#allocation10 + $0x10] sm:$0xff] %v1687
    %1692 = vst [vmem:[#allocation10 + $0x18] sm:$0xff] %v1688
    // Predicated region
    $region42: #{tpu_custom_call.1} parent=1 // pred_check
      _
    $region43: #{tpu_custom_call.1} parent=1 // pred_check_branch
      %1694 = sbr.rel (0) target = $region45
    $region44: #{tpu_custom_call.1} parent=1 // pred_region
      %s1696 = ssub.s32 512, 512
      %1697 = vsyncadd [#allocation6], %s1696
      %s1698 = sshll.u32 [#allocation10], 4
      %s1699 = int_to_ptr.vmem [resolvable:$true] %s1698
      %1704 = dma.vmem_to_hbm [thread:$0]  %s1699, 512, %s7, [#allocation6], 128, 128, 8
    $region45: #{tpu_custom_call.1} parent=1 // pred_fallthru
      _
    // Predicated region
    $region46: #{tpu_custom_call.1} parent=1 // pred_check
      _
    $region47: #{tpu_custom_call.1} parent=1 // pred_check_branch
      %1706 = sbr.rel (0) target = $region49
    $region48: #{tpu_custom_call.1} parent=1 // pred_region
      %1707 = dma.done [#allocation6], 512
    $region49: #{tpu_custom_call.1} parent=1 // pred_fallthru
      _
    %1708 = vsyncpa [#allocation5], 1
    %1709 = vsyncpa [#allocation8], 1
    %1710 = vsyncpa [#allocation6], 1

</llo_original>
